<compile_context>
chip_gen: v6e
topology: v6e:2x2x1
jax: 0.10.0
libtpu: 0.0.40
codegen_flags: <defaults>
</compile_context>

<pallas_src>
import jax
import jax.numpy as jnp
from jax import lax
from jax.experimental import pallas as pl
from jax.experimental.pallas import tpu as pltpu

HIDDEN = 64
INPUT_SIZE = 1
OUTPUT_SIZE = 2
NUM_LAYERS = 2
I_PAD = 8    # zero-pad input feature dim to a sublane multiple
B_PAD = 8    # zero-pad batch to one full sublane tile


def lstm_kernel(x_ref, wproj_ref, bcomb_ref, wbig_ref, wlin_ref, blin_ref,
                out_ref, xp_ref):
    # x_ref:     (T*B, I_PAD) f32, time-major rows [t*B + b]
    # wproj_ref: (I_PAD, 8H) layer-0 input weights scattered into combined gate
    #            columns [i0,i1,f0,f1,o0,o1,g0,g1] (layer-1 columns are 0)
    # bcomb_ref: (1, 8H) combined biases (b_ih+b_hh per layer) in the same order
    # wbig_ref:  (2H, 8H) fused recurrent weight: rows 0:H multiply h0, rows H:2H
    #            multiply h1; layer-0 columns have zero rows for h1
    # wlin_ref:  (H, O)   blin_ref: (1, O)
    # out_ref:   (B, O) softmax probabilities
    # xp_ref:    (T*B, 8H) VMEM scratch: hoisted input projection + biases
    TB, _ = x_ref.shape
    H2 = wbig_ref.shape[0]          # 2H
    H = H2 // 2
    B = out_ref.shape[0]
    T = TB // B

    wbig = wbig_ref[...]

    # Hoisted layer-0 input projection for all timesteps, all biases folded in
    # (one (T*B, I_PAD) x (I_PAD, 8H) MXU pass, off the recurrent dependence chain).
    xp_ref[...] = (jnp.dot(x_ref[...], wproj_ref[...],
                           preferred_element_type=jnp.float32) + bcomb_ref[...])

    def sigmoid(z):
        # 0.5*(tanh(z/2)+1): single EUP transcendental, no divide per gate group.
        return 0.5 * (jnp.tanh(0.5 * z) + 1.0)

    def cell(pre, c01):
        # pre lanes: [i0 i1 | f0 f1 | o0 o1 | g0 g1]; every slice is 128-aligned.
        s = sigmoid(pre[:, :6 * H])           # one wide sigmoid, 6H lanes
        i01 = s[:, :2 * H]
        f01 = s[:, 2 * H:4 * H]
        o01 = s[:, 4 * H:6 * H]
        g01 = jnp.tanh(pre[:, 6 * H:])        # one tanh, 2H lanes
        c_new = f01 * c01 + i01 * g01         # both layers updated at once
        h_new = o01 * jnp.tanh(c_new)
        return h_new, c_new

    zeros2 = jnp.zeros((B, 2 * H), jnp.float32)

    # Prologue: t=0. Hidden/cell states are zero, so pre == xp[0]. The layer-1
    # lanes of this evaluation are spurious (layer 1 has not seen h0(0) yet), so
    # mask them back to zero (one-time VPU mul, off the steady-state chain).
    h01, c01 = cell(xp_ref[0:B, :], zeros2)
    mask = (lax.broadcasted_iota(jnp.int32, (B, 2 * H), 1) < H).astype(jnp.float32)
    h01 = h01 * mask
    c01 = c01 * mask

    def step(t, carry):
        # Skewed schedule: iteration t computes layer1(t-1) and layer0(t) with a
        # single fused MXU dot on the lane-concatenated carry [h0 | h1].
        h01, c01 = carry
        row = pl.multiple_of(t * B, 8)
        pre = xp_ref[pl.ds(row, B), :] + jnp.dot(
            h01, wbig, preferred_element_type=jnp.float32)
        return cell(pre, c01)

    # Fully unrolled short fixed-trip loop (scheduler gets cross-iteration view).
    h01, c01 = lax.fori_loop(1, T, step, (h01, c01), unroll=True)

    # Drain: layer 1 at the final timestep T-1. Layer-0 lanes of this result lack
    # the x(T) term and are discarded.
    pre = bcomb_ref[...] + jnp.dot(h01, wbig, preferred_element_type=jnp.float32)
    h01, _ = cell(pre, c01)
    h1 = h01[:, H:]

    # TODO(synk): nn.LSTM applies dropout(p=0.3) to the layer-0 output only in
    # training mode; omitted here (eval-mode forward semantics).

    # Final Linear + softmax(dim=1); runs once, off the recurrent chain, so exact
    # division is kept (approx reciprocal would gain nothing here).
    logits = (jnp.dot(h1, wlin_ref[...], preferred_element_type=jnp.float32)
              + blin_ref[...])
    m = jnp.max(logits, axis=1, keepdims=True)
    e = jnp.exp(logits - m)
    out_ref[...] = e / jnp.sum(e, axis=1, keepdims=True)


def _split_gates(w_t):
    """Split the 4H axis (last dim, PyTorch order [i, f, g, o]) into gate blocks."""
    H = HIDDEN
    return w_t[..., :H], w_t[..., H:2 * H], w_t[..., 2 * H:3 * H], w_t[..., 3 * H:]


def init_params(key):
    """Deterministic PyTorch-style init (uniform(-1/sqrt(H), 1/sqrt(H)))."""
    k = 1.0 / float(jnp.sqrt(jnp.float32(HIDDEN)))
    keys = jax.random.split(key, 10)

    def u(kk, shape):
        return jax.random.uniform(kk, shape, jnp.float32, -k, k)

    return dict(
        wih0=u(keys[0], (4 * HIDDEN, INPUT_SIZE)),
        whh0=u(keys[1], (4 * HIDDEN, HIDDEN)),
        bih0=u(keys[2], (4 * HIDDEN,)),
        bhh0=u(keys[3], (4 * HIDDEN,)),
        wih1=u(keys[4], (4 * HIDDEN, HIDDEN)),
        whh1=u(keys[5], (4 * HIDDEN, HIDDEN)),
        bih1=u(keys[6], (4 * HIDDEN,)),
        bhh1=u(keys[7], (4 * HIDDEN,)),
        wlin=u(keys[8], (OUTPUT_SIZE, HIDDEN)),
        blin=u(keys[9], (OUTPUT_SIZE,)),
    )


def simple_lstm_forward(x, p):
    """x: (batch, seq, input_size) float32 -> (batch, OUTPUT_SIZE) softmax probs."""
    B, T, I = x.shape
    H = HIDDEN
    assert B <= B_PAD and I <= I_PAD

    # Time-major, pad batch + input-feature dims to sublane multiples, flatten time
    # into rows so the hoisted input projection is one 2-D matmul in the kernel.
    x_tm = jnp.transpose(x, (1, 0, 2)).astype(jnp.float32)            # (T, B, I)
    x_tm = jnp.pad(x_tm, ((0, 0), (0, B_PAD - B), (0, I_PAD - I)))    # (T, B_PAD, I_PAD)
    x2 = x_tm.reshape(T * B_PAD, I_PAD)

    # --- Build the fused, gate-reordered weights (combined order [i0,i1,f0,f1,o0,o1,g0,g1]).
    wih0_t = jnp.pad(p["wih0"].T, ((0, I_PAD - I), (0, 0)))   # (I_PAD, 4H)
    whh0_t = p["whh0"].T                                      # (H, 4H)
    wih1_t = p["wih1"].T                                      # (H, 4H)
    whh1_t = p["whh1"].T                                      # (H, 4H)
    b0 = (p["bih0"] + p["bhh0"]).reshape(1, -1)               # (1, 4H)
    b1 = (p["bih1"] + p["bhh1"]).reshape(1, -1)               # (1, 4H)

    pi0, pf0, pg0, po0 = _split_gates(wih0_t)     # layer-0 input projection
    hi0, hf0, hg0, ho0 = _split_gates(whh0_t)     # layer-0 recurrent
    ai1, af1, ag1, ao1 = _split_gates(wih1_t)     # layer-1 applied to h0
    bi1, bf1, bg1, bo1 = _split_gates(whh1_t)     # layer-1 applied to h1
    b0i, b0f, b0g, b0o = _split_gates(b0)
    b1i, b1f, b1g, b1o = _split_gates(b1)

    zH = jnp.zeros((H, H), jnp.float32)
    zI = jnp.zeros((I_PAD, H), jnp.float32)

    # (2H, 8H): rows 0:H multiply h0, rows H:2H multiply h1.
    w_big = jnp.concatenate([
        jnp.concatenate([hi0, zH], axis=0),     # i0
        jnp.concatenate([ai1, bi1], axis=0),    # i1
        jnp.concatenate([hf0, zH], axis=0),     # f0
        jnp.concatenate([af1, bf1], axis=0),    # f1
        jnp.concatenate([ho0, zH], axis=0),     # o0
        jnp.concatenate([ao1, bo1], axis=0),    # o1
        jnp.concatenate([hg0, zH], axis=0),     # g0
        jnp.concatenate([ag1, bg1], axis=0),    # g1
    ], axis=1)

    # (I_PAD, 8H): layer-0 input weights in combined positions, layer-1 columns 0.
    w_proj = jnp.concatenate([pi0, zI, pf0, zI, po0, zI, pg0, zI], axis=1)
    # (1, 8H): combined biases (folded into the hoisted projection inside the kernel).
    b_comb = jnp.concatenate([b0i, b1i, b0f, b1f, b0o, b1o, b0g, b1g], axis=1)

    wlin = p["wlin"].T                     # (H, O)
    blin = p["blin"].reshape(1, -1)        # (1, O)

    # TODO(synk): for long sequences / large batches, add a time-chunked grid
    # (state carried in VMEM scratch across an 'arbitrary' axis) and a 'parallel'
    # batch axis for v7x's 2 TensorCores; everything fits VMEM at these sizes.
    vmem = pl.BlockSpec(memory_space=pltpu.MemorySpace.VMEM)
    out = pl.pallas_call(
        lstm_kernel,
        out_shape=jax.ShapeDtypeStruct((B_PAD, OUTPUT_SIZE), jnp.float32),
        in_specs=[vmem] * 6,
        out_specs=vmem,
        scratch_shapes=[pltpu.VMEM((T * B_PAD, 8 * HIDDEN), jnp.float32)],
    )(x2, w_proj, b_comb, w_big, wlin, blin)
    return out[:B]


def reference_forward(x, p):
    """Pure-JAX reference replicating PyTorch SimpleLSTM.forward (eval mode)."""
    B, T, _ = x.shape
    H = HIDDEN

    def cell(inp, h, c, wih, whh, bih, bhh):
        g = inp @ wih.T + bih + h @ whh.T + bhh
        i = jax.nn.sigmoid(g[:, :H])
        f = jax.nn.sigmoid(g[:, H:2 * H])
        gg = jnp.tanh(g[:, 2 * H:3 * H])
        o = jax.nn.sigmoid(g[:, 3 * H:])
        c = f * c + i * gg
        h = o * jnp.tanh(c)
        return h, c

    h0 = c0 = h1 = c1 = jnp.zeros((B, H), jnp.float32)
    for t in range(T):
        h0, c0 = cell(x[:, t, :], h0, c0, p["wih0"], p["whh0"], p["bih0"], p["bhh0"])
        h1, c1 = cell(h0, h1, c1, p["wih1"], p["whh1"], p["bih1"], p["bhh1"])
    logits = h1 @ p["wlin"].T + p["blin"]
    return jax.nn.softmax(logits, axis=1)


if __name__ == "__main__":
    key = jax.random.PRNGKey(0)
    k_param, k_x = jax.random.split(key)

    batch, seq = 2, 8
    params = init_params(k_param)
    x = jax.random.normal(k_x, (batch, seq, INPUT_SIZE), dtype=jnp.float32)

    out = jax.block_until_ready(simple_lstm_forward(x, params))
    ref = reference_forward(x, params)

    assert out.shape == (batch, OUTPUT_SIZE)
    assert jnp.allclose(out, ref, rtol=1e-4, atol=1e-5), (out, ref)
    print("KERNEL_OK")
</pallas_src>

<mosaic_0001>
module attributes {stable_mosaic.version = 11 : i64} {
  func.func @lstm_kernel(%arg0: memref<64x8xf32, #tpu.memory_space<vmem>>, %arg1: memref<8x512xf32, #tpu.memory_space<vmem>>, %arg2: memref<1x512xf32, #tpu.memory_space<vmem>>, %arg3: memref<128x512xf32, #tpu.memory_space<vmem>>, %arg4: memref<64x2xf32, #tpu.memory_space<vmem>>, %arg5: memref<1x2xf32, #tpu.memory_space<vmem>>, %arg6: memref<8x2xf32, #tpu.memory_space<vmem>>, %arg7: memref<64x512xf32, #tpu.memory_space<vmem>>) attributes {dimension_semantics = [], scalar_prefetch = 0 : i64, scratch_operands = 1 : i64, tpu.core_type = #tpu.core_type<tc>} {
    %c0 = arith.constant 0 : index
    %c0_0 = arith.constant 0 : index
    %0 = vector.load %arg3[%c0, %c0_0] : memref<128x512xf32, #tpu.memory_space<vmem>>, vector<128x512xf32>
    %c0_1 = arith.constant 0 : index
    %c0_2 = arith.constant 0 : index
    %1 = vector.load %arg0[%c0_1, %c0_2] : memref<64x8xf32, #tpu.memory_space<vmem>>, vector<64x8xf32>
    %c0_3 = arith.constant 0 : index
    %c0_4 = arith.constant 0 : index
    %2 = vector.load %arg1[%c0_3, %c0_4] : memref<8x512xf32, #tpu.memory_space<vmem>>, vector<8x512xf32>
    %cst = arith.constant dense<0.000000e+00> : vector<64x512xf32>
    %3 = tpu.matmul %1, %2, %cst {dimension_numbers = #tpu.dot_dimension_numbers<[1], [0], [0], [1], [0, 0, 1, 1], [], []>} : vector<64x8xf32>, vector<8x512xf32>, vector<64x512xf32> -> vector<64x512xf32>
    %c0_5 = arith.constant 0 : index
    %c0_6 = arith.constant 0 : index
    %4 = vector.load %arg2[%c0_5, %c0_6] : memref<1x512xf32, #tpu.memory_space<vmem>>, vector<1x512xf32>
    %5 = vector.broadcast %4 : vector<1x512xf32> to vector<64x512xf32>
    %6 = arith.addf %3, %5 : vector<64x512xf32>
    %c0_7 = arith.constant 0 : index
    %c0_8 = arith.constant 0 : index
    %7 = vector.load %arg7[%c0_7, %c0_8] : memref<64x512xf32, #tpu.memory_space<vmem>>, vector<64x512xf32>
    tpu.vector_store %arg7[%c0_7, %c0_8], %6 {strides = array<i32>} : memref<64x512xf32, #tpu.memory_space<vmem>>, vector<64x512xf32>,
    %cst_9 = arith.constant 0.000000e+00 : f32
    %8 = vector.broadcast %cst_9 : f32 to vector<8x128xf32>
    %c0_10 = arith.constant 0 : index
    %c0_11 = arith.constant 0 : index
    %9 = vector.load %arg7[%c0_10, %c0_11] : memref<64x512xf32, #tpu.memory_space<vmem>>, vector<8x512xf32>
    %10 = vector.extract_strided_slice %9 {offsets = [0, 0], sizes = [8, 384], strides = [1, 1]} : vector<8x512xf32> to vector<8x384xf32>
    %cst_12 = arith.constant 5.000000e-01 : f32
    %11 = vector.broadcast %cst_12 : f32 to vector<8x384xf32>
    %12 = arith.mulf %11, %10 : vector<8x384xf32>
    %13 = math.tanh %12 : vector<8x384xf32>
    %cst_13 = arith.constant 1.000000e+00 : f32
    %14 = vector.broadcast %cst_13 : f32 to vector<8x384xf32>
    %15 = arith.addf %13, %14 : vector<8x384xf32>
    %cst_14 = arith.constant 5.000000e-01 : f32
    %16 = vector.broadcast %cst_14 : f32 to vector<8x384xf32>
    %17 = arith.mulf %16, %15 : vector<8x384xf32>
    %18 = vector.extract_strided_slice %17 {offsets = [0, 0], sizes = [8, 128], strides = [1, 1]} : vector<8x384xf32> to vector<8x128xf32>
    %19 = vector.extract_strided_slice %17 {offsets = [0, 128], sizes = [8, 128], strides = [1, 1]} : vector<8x384xf32> to vector<8x128xf32>
    %20 = vector.extract_strided_slice %17 {offsets = [0, 256], sizes = [8, 128], strides = [1, 1]} : vector<8x384xf32> to vector<8x128xf32>
    %21 = vector.extract_strided_slice %9 {offsets = [0, 384], sizes = [8, 128], strides = [1, 1]} : vector<8x512xf32> to vector<8x128xf32>
    %22 = math.tanh %21 : vector<8x128xf32>
    %23 = arith.mulf %19, %8 : vector<8x128xf32>
    %24 = arith.mulf %18, %22 : vector<8x128xf32>
    %25 = arith.addf %23, %24 : vector<8x128xf32>
    %26 = math.tanh %25 : vector<8x128xf32>
    %27 = arith.mulf %20, %26 : vector<8x128xf32>
    %28 = tpu.iota {dimensions = array<i32: 1>} : vector<8x128xi32>
    %c64_i32 = arith.constant 64 : i32
    %29 = vector.broadcast %c64_i32 : i32 to vector<8x128xi32>
    %30 = arith.cmpi slt, %28, %29 : vector<8x128xi32>
    %31 = arith.extui %30 : vector<8x128xi1> to vector<8x128xi32>
    %32 = arith.sitofp %31 : vector<8x128xi32> to vector<8x128xf32>
    %33 = arith.mulf %27, %32 : vector<8x128xf32>
    %34 = arith.mulf %25, %32 : vector<8x128xf32>
    %c1_i32 = arith.constant 1 : i32
    %c8_i32 = arith.constant 8 : i32
    %35 = arith.muli %c1_i32, %c8_i32 : i32
    %36 = tpu.assume_multiple %35, 8 : i32
    %37 = arith.index_cast %36 : i32 to index
    %c0_15 = arith.constant 0 : index
    %38 = vector.load %arg7[%37, %c0_15] : memref<64x512xf32, #tpu.memory_space<vmem>>, vector<8x512xf32>
    %cst_16 = arith.constant dense<0.000000e+00> : vector<8x512xf32>
    %39 = tpu.matmul %33, %0, %cst_16 {dimension_numbers = #tpu.dot_dimension_numbers<[1], [0], [0], [1], [0, 0, 1, 1], [], []>} : vector<8x128xf32>, vector<128x512xf32>, vector<8x512xf32> -> vector<8x512xf32>
    %40 = arith.addf %38, %39 : vector<8x512xf32>
    %41 = vector.extract_strided_slice %40 {offsets = [0, 0], sizes = [8, 384], strides = [1, 1]} : vector<8x512xf32> to vector<8x384xf32>
    %cst_17 = arith.constant 5.000000e-01 : f32
    %42 = vector.broadcast %cst_17 : f32 to vector<8x384xf32>
    %43 = arith.mulf %42, %41 : vector<8x384xf32>
    %44 = math.tanh %43 : vector<8x384xf32>
    %cst_18 = arith.constant 1.000000e+00 : f32
    %45 = vector.broadcast %cst_18 : f32 to vector<8x384xf32>
    %46 = arith.addf %44, %45 : vector<8x384xf32>
    %cst_19 = arith.constant 5.000000e-01 : f32
    %47 = vector.broadcast %cst_19 : f32 to vector<8x384xf32>
    %48 = arith.mulf %47, %46 : vector<8x384xf32>
    %49 = vector.extract_strided_slice %48 {offsets = [0, 0], sizes = [8, 128], strides = [1, 1]} : vector<8x384xf32> to vector<8x128xf32>
    %50 = vector.extract_strided_slice %48 {offsets = [0, 128], sizes = [8, 128], strides = [1, 1]} : vector<8x384xf32> to vector<8x128xf32>
    %51 = vector.extract_strided_slice %48 {offsets = [0, 256], sizes = [8, 128], strides = [1, 1]} : vector<8x384xf32> to vector<8x128xf32>
    %52 = vector.extract_strided_slice %40 {offsets = [0, 384], sizes = [8, 128], strides = [1, 1]} : vector<8x512xf32> to vector<8x128xf32>
    %53 = math.tanh %52 : vector<8x128xf32>
    %54 = arith.mulf %50, %34 : vector<8x128xf32>
    %55 = arith.mulf %49, %53 : vector<8x128xf32>
    %56 = arith.addf %54, %55 : vector<8x128xf32>
    %57 = math.tanh %56 : vector<8x128xf32>
    %58 = arith.mulf %51, %57 : vector<8x128xf32>
    %c2_i32 = arith.constant 2 : i32
    %c8_i32_20 = arith.constant 8 : i32
    %59 = arith.muli %c2_i32, %c8_i32_20 : i32
    %60 = tpu.assume_multiple %59, 8 : i32
    %61 = arith.index_cast %60 : i32 to index
    %c0_21 = arith.constant 0 : index
    %62 = vector.load %arg7[%61, %c0_21] : memref<64x512xf32, #tpu.memory_space<vmem>>, vector<8x512xf32>
    %cst_22 = arith.constant dense<0.000000e+00> : vector<8x512xf32>
    %63 = tpu.matmul %58, %0, %cst_22 {dimension_numbers = #tpu.dot_dimension_numbers<[1], [0], [0], [1], [0, 0, 1, 1], [], []>} : vector<8x128xf32>, vector<128x512xf32>, vector<8x512xf32> -> vector<8x512xf32>
    %64 = arith.addf %62, %63 : vector<8x512xf32>
    %65 = vector.extract_strided_slice %64 {offsets = [0, 0], sizes = [8, 384], strides = [1, 1]} : vector<8x512xf32> to vector<8x384xf32>
    %cst_23 = arith.constant 5.000000e-01 : f32
    %66 = vector.broadcast %cst_23 : f32 to vector<8x384xf32>
    %67 = arith.mulf %66, %65 : vector<8x384xf32>
    %68 = math.tanh %67 : vector<8x384xf32>
    %cst_24 = arith.constant 1.000000e+00 : f32
    %69 = vector.broadcast %cst_24 : f32 to vector<8x384xf32>
    %70 = arith.addf %68, %69 : vector<8x384xf32>
    %cst_25 = arith.constant 5.000000e-01 : f32
    %71 = vector.broadcast %cst_25 : f32 to vector<8x384xf32>
    %72 = arith.mulf %71, %70 : vector<8x384xf32>
    %73 = vector.extract_strided_slice %72 {offsets = [0, 0], sizes = [8, 128], strides = [1, 1]} : vector<8x384xf32> to vector<8x128xf32>
    %74 = vector.extract_strided_slice %72 {offsets = [0, 128], sizes = [8, 128], strides = [1, 1]} : vector<8x384xf32> to vector<8x128xf32>
    %75 = vector.extract_strided_slice %72 {offsets = [0, 256], sizes = [8, 128], strides = [1, 1]} : vector<8x384xf32> to vector<8x128xf32>
    %76 = vector.extract_strided_slice %64 {offsets = [0, 384], sizes = [8, 128], strides = [1, 1]} : vector<8x512xf32> to vector<8x128xf32>
    %77 = math.tanh %76 : vector<8x128xf32>
    %78 = arith.mulf %74, %56 : vector<8x128xf32>
    %79 = arith.mulf %73, %77 : vector<8x128xf32>
    %80 = arith.addf %78, %79 : vector<8x128xf32>
    %81 = math.tanh %80 : vector<8x128xf32>
    %82 = arith.mulf %75, %81 : vector<8x128xf32>
    %c3_i32 = arith.constant 3 : i32
    %c8_i32_26 = arith.constant 8 : i32
    %83 = arith.muli %c3_i32, %c8_i32_26 : i32
    %84 = tpu.assume_multiple %83, 8 : i32
    %85 = arith.index_cast %84 : i32 to index
    %c0_27 = arith.constant 0 : index
    %86 = vector.load %arg7[%85, %c0_27] : memref<64x512xf32, #tpu.memory_space<vmem>>, vector<8x512xf32>
    %cst_28 = arith.constant dense<0.000000e+00> : vector<8x512xf32>
    %87 = tpu.matmul %82, %0, %cst_28 {dimension_numbers = #tpu.dot_dimension_numbers<[1], [0], [0], [1], [0, 0, 1, 1], [], []>} : vector<8x128xf32>, vector<128x512xf32>, vector<8x512xf32> -> vector<8x512xf32>
    %88 = arith.addf %86, %87 : vector<8x512xf32>
    %89 = vector.extract_strided_slice %88 {offsets = [0, 0], sizes = [8, 384], strides = [1, 1]} : vector<8x512xf32> to vector<8x384xf32>
    %cst_29 = arith.constant 5.000000e-01 : f32
    %90 = vector.broadcast %cst_29 : f32 to vector<8x384xf32>
    %91 = arith.mulf %90, %89 : vector<8x384xf32>
    %92 = math.tanh %91 : vector<8x384xf32>
    %cst_30 = arith.constant 1.000000e+00 : f32
    %93 = vector.broadcast %cst_30 : f32 to vector<8x384xf32>
    %94 = arith.addf %92, %93 : vector<8x384xf32>
    %cst_31 = arith.constant 5.000000e-01 : f32
    %95 = vector.broadcast %cst_31 : f32 to vector<8x384xf32>
    %96 = arith.mulf %95, %94 : vector<8x384xf32>
    %97 = vector.extract_strided_slice %96 {offsets = [0, 0], sizes = [8, 128], strides = [1, 1]} : vector<8x384xf32> to vector<8x128xf32>
    %98 = vector.extract_strided_slice %96 {offsets = [0, 128], sizes = [8, 128], strides = [1, 1]} : vector<8x384xf32> to vector<8x128xf32>
    %99 = vector.extract_strided_slice %96 {offsets = [0, 256], sizes = [8, 128], strides = [1, 1]} : vector<8x384xf32> to vector<8x128xf32>
    %100 = vector.extract_strided_slice %88 {offsets = [0, 384], sizes = [8, 128], strides = [1, 1]} : vector<8x512xf32> to vector<8x128xf32>
    %101 = math.tanh %100 : vector<8x128xf32>
    %102 = arith.mulf %98, %80 : vector<8x128xf32>
    %103 = arith.mulf %97, %101 : vector<8x128xf32>
    %104 = arith.addf %102, %103 : vector<8x128xf32>
    %105 = math.tanh %104 : vector<8x128xf32>
    %106 = arith.mulf %99, %105 : vector<8x128xf32>
    %c4_i32 = arith.constant 4 : i32
    %c8_i32_32 = arith.constant 8 : i32
    %107 = arith.muli %c4_i32, %c8_i32_32 : i32
    %108 = tpu.assume_multiple %107, 8 : i32
    %109 = arith.index_cast %108 : i32 to index
    %c0_33 = arith.constant 0 : index
    %110 = vector.load %arg7[%109, %c0_33] : memref<64x512xf32, #tpu.memory_space<vmem>>, vector<8x512xf32>
    %cst_34 = arith.constant dense<0.000000e+00> : vector<8x512xf32>
    %111 = tpu.matmul %106, %0, %cst_34 {dimension_numbers = #tpu.dot_dimension_numbers<[1], [0], [0], [1], [0, 0, 1, 1], [], []>} : vector<8x128xf32>, vector<128x512xf32>, vector<8x512xf32> -> vector<8x512xf32>
    %112 = arith.addf %110, %111 : vector<8x512xf32>
    %113 = vector.extract_strided_slice %112 {offsets = [0, 0], sizes = [8, 384], strides = [1, 1]} : vector<8x512xf32> to vector<8x384xf32>
    %cst_35 = arith.constant 5.000000e-01 : f32
    %114 = vector.broadcast %cst_35 : f32 to vector<8x384xf32>
    %115 = arith.mulf %114, %113 : vector<8x384xf32>
    %116 = math.tanh %115 : vector<8x384xf32>
    %cst_36 = arith.constant 1.000000e+00 : f32
    %117 = vector.broadcast %cst_36 : f32 to vector<8x384xf32>
    %118 = arith.addf %116, %117 : vector<8x384xf32>
    %cst_37 = arith.constant 5.000000e-01 : f32
    %119 = vector.broadcast %cst_37 : f32 to vector<8x384xf32>
    %120 = arith.mulf %119, %118 : vector<8x384xf32>
    %121 = vector.extract_strided_slice %120 {offsets = [0, 0], sizes = [8, 128], strides = [1, 1]} : vector<8x384xf32> to vector<8x128xf32>
    %122 = vector.extract_strided_slice %120 {offsets = [0, 128], sizes = [8, 128], strides = [1, 1]} : vector<8x384xf32> to vector<8x128xf32>
    %123 = vector.extract_strided_slice %120 {offsets = [0, 256], sizes = [8, 128], strides = [1, 1]} : vector<8x384xf32> to vector<8x128xf32>
    %124 = vector.extract_strided_slice %112 {offsets = [0, 384], sizes = [8, 128], strides = [1, 1]} : vector<8x512xf32> to vector<8x128xf32>
    %125 = math.tanh %124 : vector<8x128xf32>
    %126 = arith.mulf %122, %104 : vector<8x128xf32>
    %127 = arith.mulf %121, %125 : vector<8x128xf32>
    %128 = arith.addf %126, %127 : vector<8x128xf32>
    %129 = math.tanh %128 : vector<8x128xf32>
    %130 = arith.mulf %123, %129 : vector<8x128xf32>
    %c5_i32 = arith.constant 5 : i32
    %c8_i32_38 = arith.constant 8 : i32
    %131 = arith.muli %c5_i32, %c8_i32_38 : i32
    %132 = tpu.assume_multiple %131, 8 : i32
    %133 = arith.index_cast %132 : i32 to index
    %c0_39 = arith.constant 0 : index
    %134 = vector.load %arg7[%133, %c0_39] : memref<64x512xf32, #tpu.memory_space<vmem>>, vector<8x512xf32>
    %cst_40 = arith.constant dense<0.000000e+00> : vector<8x512xf32>
    %135 = tpu.matmul %130, %0, %cst_40 {dimension_numbers = #tpu.dot_dimension_numbers<[1], [0], [0], [1], [0, 0, 1, 1], [], []>} : vector<8x128xf32>, vector<128x512xf32>, vector<8x512xf32> -> vector<8x512xf32>
    %136 = arith.addf %134, %135 : vector<8x512xf32>
    %137 = vector.extract_strided_slice %136 {offsets = [0, 0], sizes = [8, 384], strides = [1, 1]} : vector<8x512xf32> to vector<8x384xf32>
    %cst_41 = arith.constant 5.000000e-01 : f32
    %138 = vector.broadcast %cst_41 : f32 to vector<8x384xf32>
    %139 = arith.mulf %138, %137 : vector<8x384xf32>
    %140 = math.tanh %139 : vector<8x384xf32>
    %cst_42 = arith.constant 1.000000e+00 : f32
    %141 = vector.broadcast %cst_42 : f32 to vector<8x384xf32>
    %142 = arith.addf %140, %141 : vector<8x384xf32>
    %cst_43 = arith.constant 5.000000e-01 : f32
    %143 = vector.broadcast %cst_43 : f32 to vector<8x384xf32>
    %144 = arith.mulf %143, %142 : vector<8x384xf32>
    %145 = vector.extract_strided_slice %144 {offsets = [0, 0], sizes = [8, 128], strides = [1, 1]} : vector<8x384xf32> to vector<8x128xf32>
    %146 = vector.extract_strided_slice %144 {offsets = [0, 128], sizes = [8, 128], strides = [1, 1]} : vector<8x384xf32> to vector<8x128xf32>
    %147 = vector.extract_strided_slice %144 {offsets = [0, 256], sizes = [8, 128], strides = [1, 1]} : vector<8x384xf32> to vector<8x128xf32>
    %148 = vector.extract_strided_slice %136 {offsets = [0, 384], sizes = [8, 128], strides = [1, 1]} : vector<8x512xf32> to vector<8x128xf32>
    %149 = math.tanh %148 : vector<8x128xf32>
    %150 = arith.mulf %146, %128 : vector<8x128xf32>
    %151 = arith.mulf %145, %149 : vector<8x128xf32>
    %152 = arith.addf %150, %151 : vector<8x128xf32>
    %153 = math.tanh %152 : vector<8x128xf32>
    %154 = arith.mulf %147, %153 : vector<8x128xf32>
    %c6_i32 = arith.constant 6 : i32
    %c8_i32_44 = arith.constant 8 : i32
    %155 = arith.muli %c6_i32, %c8_i32_44 : i32
    %156 = tpu.assume_multiple %155, 8 : i32
    %157 = arith.index_cast %156 : i32 to index
    %c0_45 = arith.constant 0 : index
    %158 = vector.load %arg7[%157, %c0_45] : memref<64x512xf32, #tpu.memory_space<vmem>>, vector<8x512xf32>
    %cst_46 = arith.constant dense<0.000000e+00> : vector<8x512xf32>
    %159 = tpu.matmul %154, %0, %cst_46 {dimension_numbers = #tpu.dot_dimension_numbers<[1], [0], [0], [1], [0, 0, 1, 1], [], []>} : vector<8x128xf32>, vector<128x512xf32>, vector<8x512xf32> -> vector<8x512xf32>
    %160 = arith.addf %158, %159 : vector<8x512xf32>
    %161 = vector.extract_strided_slice %160 {offsets = [0, 0], sizes = [8, 384], strides = [1, 1]} : vector<8x512xf32> to vector<8x384xf32>
    %cst_47 = arith.constant 5.000000e-01 : f32
    %162 = vector.broadcast %cst_47 : f32 to vector<8x384xf32>
    %163 = arith.mulf %162, %161 : vector<8x384xf32>
    %164 = math.tanh %163 : vector<8x384xf32>
    %cst_48 = arith.constant 1.000000e+00 : f32
    %165 = vector.broadcast %cst_48 : f32 to vector<8x384xf32>
    %166 = arith.addf %164, %165 : vector<8x384xf32>
    %cst_49 = arith.constant 5.000000e-01 : f32
    %167 = vector.broadcast %cst_49 : f32 to vector<8x384xf32>
    %168 = arith.mulf %167, %166 : vector<8x384xf32>
    %169 = vector.extract_strided_slice %168 {offsets = [0, 0], sizes = [8, 128], strides = [1, 1]} : vector<8x384xf32> to vector<8x128xf32>
    %170 = vector.extract_strided_slice %168 {offsets = [0, 128], sizes = [8, 128], strides = [1, 1]} : vector<8x384xf32> to vector<8x128xf32>
    %171 = vector.extract_strided_slice %168 {offsets = [0, 256], sizes = [8, 128], strides = [1, 1]} : vector<8x384xf32> to vector<8x128xf32>
    %172 = vector.extract_strided_slice %160 {offsets = [0, 384], sizes = [8, 128], strides = [1, 1]} : vector<8x512xf32> to vector<8x128xf32>
    %173 = math.tanh %172 : vector<8x128xf32>
    %174 = arith.mulf %170, %152 : vector<8x128xf32>
    %175 = arith.mulf %169, %173 : vector<8x128xf32>
    %176 = arith.addf %174, %175 : vector<8x128xf32>
    %177 = math.tanh %176 : vector<8x128xf32>
    %178 = arith.mulf %171, %177 : vector<8x128xf32>
    %c7_i32 = arith.constant 7 : i32
    %c8_i32_50 = arith.constant 8 : i32
    %179 = arith.muli %c7_i32, %c8_i32_50 : i32
    %180 = tpu.assume_multiple %179, 8 : i32
    %181 = arith.index_cast %180 : i32 to index
    %c0_51 = arith.constant 0 : index
    %182 = vector.load %arg7[%181, %c0_51] : memref<64x512xf32, #tpu.memory_space<vmem>>, vector<8x512xf32>
    %cst_52 = arith.constant dense<0.000000e+00> : vector<8x512xf32>
    %183 = tpu.matmul %178, %0, %cst_52 {dimension_numbers = #tpu.dot_dimension_numbers<[1], [0], [0], [1], [0, 0, 1, 1], [], []>} : vector<8x128xf32>, vector<128x512xf32>, vector<8x512xf32> -> vector<8x512xf32>
    %184 = arith.addf %182, %183 : vector<8x512xf32>
    %185 = vector.extract_strided_slice %184 {offsets = [0, 0], sizes = [8, 384], strides = [1, 1]} : vector<8x512xf32> to vector<8x384xf32>
    %cst_53 = arith.constant 5.000000e-01 : f32
    %186 = vector.broadcast %cst_53 : f32 to vector<8x384xf32>
    %187 = arith.mulf %186, %185 : vector<8x384xf32>
    %188 = math.tanh %187 : vector<8x384xf32>
    %cst_54 = arith.constant 1.000000e+00 : f32
    %189 = vector.broadcast %cst_54 : f32 to vector<8x384xf32>
    %190 = arith.addf %188, %189 : vector<8x384xf32>
    %cst_55 = arith.constant 5.000000e-01 : f32
    %191 = vector.broadcast %cst_55 : f32 to vector<8x384xf32>
    %192 = arith.mulf %191, %190 : vector<8x384xf32>
    %193 = vector.extract_strided_slice %192 {offsets = [0, 0], sizes = [8, 128], strides = [1, 1]} : vector<8x384xf32> to vector<8x128xf32>
    %194 = vector.extract_strided_slice %192 {offsets = [0, 128], sizes = [8, 128], strides = [1, 1]} : vector<8x384xf32> to vector<8x128xf32>
    %195 = vector.extract_strided_slice %192 {offsets = [0, 256], sizes = [8, 128], strides = [1, 1]} : vector<8x384xf32> to vector<8x128xf32>
    %196 = vector.extract_strided_slice %184 {offsets = [0, 384], sizes = [8, 128], strides = [1, 1]} : vector<8x512xf32> to vector<8x128xf32>
    %197 = math.tanh %196 : vector<8x128xf32>
    %198 = arith.mulf %194, %176 : vector<8x128xf32>
    %199 = arith.mulf %193, %197 : vector<8x128xf32>
    %200 = arith.addf %198, %199 : vector<8x128xf32>
    %201 = math.tanh %200 : vector<8x128xf32>
    %202 = arith.mulf %195, %201 : vector<8x128xf32>
    %c7_i32_56 = arith.constant 7 : i32
    %c0_57 = arith.constant 0 : index
    %c0_58 = arith.constant 0 : index
    %203 = vector.load %arg2[%c0_57, %c0_58] : memref<1x512xf32, #tpu.memory_space<vmem>>, vector<1x512xf32>
    %cst_59 = arith.constant dense<0.000000e+00> : vector<8x512xf32>
    %204 = tpu.matmul %202, %0, %cst_59 {dimension_numbers = #tpu.dot_dimension_numbers<[1], [0], [0], [1], [0, 0, 1, 1], [], []>} : vector<8x128xf32>, vector<128x512xf32>, vector<8x512xf32> -> vector<8x512xf32>
    %205 = vector.broadcast %203 : vector<1x512xf32> to vector<8x512xf32>
    %206 = arith.addf %205, %204 : vector<8x512xf32>
    %207 = vector.extract_strided_slice %206 {offsets = [0, 0], sizes = [8, 384], strides = [1, 1]} : vector<8x512xf32> to vector<8x384xf32>
    %cst_60 = arith.constant 5.000000e-01 : f32
    %208 = vector.broadcast %cst_60 : f32 to vector<8x384xf32>
    %209 = arith.mulf %208, %207 : vector<8x384xf32>
    %210 = math.tanh %209 : vector<8x384xf32>
    %cst_61 = arith.constant 1.000000e+00 : f32
    %211 = vector.broadcast %cst_61 : f32 to vector<8x384xf32>
    %212 = arith.addf %210, %211 : vector<8x384xf32>
    %cst_62 = arith.constant 5.000000e-01 : f32
    %213 = vector.broadcast %cst_62 : f32 to vector<8x384xf32>
    %214 = arith.mulf %213, %212 : vector<8x384xf32>
    %215 = vector.extract_strided_slice %214 {offsets = [0, 0], sizes = [8, 128], strides = [1, 1]} : vector<8x384xf32> to vector<8x128xf32>
    %216 = vector.extract_strided_slice %214 {offsets = [0, 128], sizes = [8, 128], strides = [1, 1]} : vector<8x384xf32> to vector<8x128xf32>
    %217 = vector.extract_strided_slice %214 {offsets = [0, 256], sizes = [8, 128], strides = [1, 1]} : vector<8x384xf32> to vector<8x128xf32>
    %218 = vector.extract_strided_slice %206 {offsets = [0, 384], sizes = [8, 128], strides = [1, 1]} : vector<8x512xf32> to vector<8x128xf32>
    %219 = math.tanh %218 : vector<8x128xf32>
    %220 = arith.mulf %216, %200 : vector<8x128xf32>
    %221 = arith.mulf %215, %219 : vector<8x128xf32>
    %222 = arith.addf %220, %221 : vector<8x128xf32>
    %223 = math.tanh %222 : vector<8x128xf32>
    %224 = arith.mulf %217, %223 : vector<8x128xf32>
    %225 = vector.extract_strided_slice %224 {offsets = [0, 64], sizes = [8, 64], strides = [1, 1]} : vector<8x128xf32> to vector<8x64xf32>
    %c0_63 = arith.constant 0 : index
    %c0_64 = arith.constant 0 : index
    %226 = vector.load %arg4[%c0_63, %c0_64] : memref<64x2xf32, #tpu.memory_space<vmem>>, vector<64x2xf32>
    %cst_65 = arith.constant dense<0.000000e+00> : vector<8x2xf32>
    %227 = tpu.matmul %225, %226, %cst_65 {dimension_numbers = #tpu.dot_dimension_numbers<[1], [0], [0], [1], [0, 0, 1, 1], [], []>} : vector<8x64xf32>, vector<64x2xf32>, vector<8x2xf32> -> vector<8x2xf32>
    %c0_66 = arith.constant 0 : index
    %c0_67 = arith.constant 0 : index
    %228 = vector.load %arg5[%c0_66, %c0_67] : memref<1x2xf32, #tpu.memory_space<vmem>>, vector<1x2xf32>
    %229 = vector.broadcast %228 : vector<1x2xf32> to vector<8x2xf32>
    %230 = arith.addf %227, %229 : vector<8x2xf32>
    %cst_68 = arith.constant dense<0xFF800000> : vector<8xf32>
    %231 = vector.multi_reduction <maximumf>, %230, %cst_68 [1] : vector<8x2xf32> to vector<8xf32>
    %232 = vector.shape_cast %231 : vector<8xf32> to vector<8x1xf32>
    %233 = vector.broadcast %232 : vector<8x1xf32> to vector<8x2xf32>
    %234 = arith.subf %230, %233 : vector<8x2xf32>
    %235 = math.exp %234 : vector<8x2xf32>
    %cst_69 = arith.constant dense<0.000000e+00> : vector<8xf32>
    %236 = vector.multi_reduction <add>, %235, %cst_69 [1] : vector<8x2xf32> to vector<8xf32>
    %237 = vector.shape_cast %236 : vector<8xf32> to vector<8x1xf32>
    %238 = vector.broadcast %237 : vector<8x1xf32> to vector<8x2xf32>
    %239 = arith.divf %235, %238 : vector<8x2xf32>
    %c0_70 = arith.constant 0 : index
    %c0_71 = arith.constant 0 : index
    %240 = vector.load %arg6[%c0_70, %c0_71] : memref<8x2xf32, #tpu.memory_space<vmem>>, vector<8x2xf32>
    tpu.vector_store %arg6[%c0_70, %c0_71], %239 {strides = array<i32>} : memref<8x2xf32, #tpu.memory_space<vmem>>, vector<8x2xf32>,
    return
  }
}

</mosaic_0001>

<llo_original>
// kernel: tpu_custom_call.1
$region0: #{tpu_custom_call.1}
  #allocation0 [shape = 'u32[]', space=smem, size = 0x4, offset = 0x4, fixed_abs, tag = 'smem constant byte address 0x4 - core index']
  #allocation1 [shape = 'u32[144,128]{1,0:T(1,128)}', space=vmem, size = 0x12000, scoped, tag = 'internal scratch']
  #allocation2 [shape = 'f32[64,512]{1,0:T(8,128)}', space=vmem, size = 0x20000, scoped, tag = 'scratch operand']
  %s0 = inlined_call_operand.vmem [shape: f32[64,8], index: 0, kind: input, shape index: {}]
  %s1 = inlined_call_operand.vmem [shape: f32[8,512], index: 1, kind: input, shape index: {}]
  %s2 = inlined_call_operand.vmem [shape: f32[1,512], index: 2, kind: input, shape index: {}]
  %s3 = inlined_call_operand.hbm [shape: f32[128,512], index: 3, kind: input, shape index: {}]
  %s4 = inlined_call_operand.vmem [shape: f32[64,2], index: 4, kind: input, shape index: {}]
  %s5 = inlined_call_operand.vmem [shape: f32[1,2], index: 5, kind: input, shape index: {}]
  %s6 = inlined_call_operand.vmem [shape: f32[8,2], index: 6, kind: output, shape index: {}]
  %s7 = sld [smem:[#allocation0]]
  $region38: #{tpu_custom_call.1} parent=0
    _
  %s9 = ssub.s32 1, %s7
  %s10 = scalar_select 0, %s9, %s7
  $region1: #{tpu_custom_call.1} parent=0
    #allocation3 [shape = 'u8[262144]{0}', space=vmem, size = 0x40000, scoped, tag = 'input window, operand 3, single buffered']
    #allocation4 [shape = 's32[1]{0}', space=sflag, size = 0x4, scoped, tag = 'scoped memory for tpu_custom_call.1']
    %11 = vsyncpa [#allocation4], 0
    // Predicated region
    $region2: #{tpu_custom_call.1} parent=1 // pred_check
      _
    $region3: #{tpu_custom_call.1} parent=1 // pred_check_branch
      %13 = sbr.rel (0) target = $region5
    $region4: #{tpu_custom_call.1} parent=1 // pred_region
      _
    $region5: #{tpu_custom_call.1} parent=1 // pred_fallthru
      _
    // Predicated region
    $region6: #{tpu_custom_call.1} parent=1 // pred_check
      _
    $region7: #{tpu_custom_call.1} parent=1 // pred_check_branch
      %15 = sbr.rel (0) target = $region9
    $region8: #{tpu_custom_call.1} parent=1 // pred_region
      _
    $region9: #{tpu_custom_call.1} parent=1 // pred_fallthru
      _
    // Predicated region
    $region10: #{tpu_custom_call.1} parent=1 // pred_check
      _
    $region11: #{tpu_custom_call.1} parent=1 // pred_check_branch
      %17 = sbr.rel (0) target = $region13
    $region12: #{tpu_custom_call.1} parent=1 // pred_region
      _
    $region13: #{tpu_custom_call.1} parent=1 // pred_fallthru
      _
    // Predicated region
    $region14: #{tpu_custom_call.1} parent=1 // pred_check
      _
    $region15: #{tpu_custom_call.1} parent=1 // pred_check_branch
      %19 = sbr.rel (0) target = $region17
    $region16: #{tpu_custom_call.1} parent=1 // pred_region
      %s21 = ssub.s32 8192, 8192
      %22 = vsyncadd [#allocation4], %s21
      %s23 = sshll.u32 [#allocation3], 4
      %s24 = int_to_ptr.vmem [resolvable:$true] %s23
      %29 = dma.hbm_to_vmem [thread:$0]  %s3, 8192, %s24, [#allocation4], 512, 512, 32
    $region17: #{tpu_custom_call.1} parent=1 // pred_fallthru
      _
    // Predicated region
    $region18: #{tpu_custom_call.1} parent=1 // pred_check
      _
    $region19: #{tpu_custom_call.1} parent=1 // pred_check_branch
      %31 = sbr.rel (0) target = $region21
    $region20: #{tpu_custom_call.1} parent=1 // pred_region
      _
    $region21: #{tpu_custom_call.1} parent=1 // pred_fallthru
      _
    // Predicated region
    $region22: #{tpu_custom_call.1} parent=1 // pred_check
      _
    $region23: #{tpu_custom_call.1} parent=1 // pred_check_branch
      %33 = sbr.rel (0) target = $region25
    $region24: #{tpu_custom_call.1} parent=1 // pred_region
      _
    $region25: #{tpu_custom_call.1} parent=1 // pred_fallthru
      _
    // Predicated region
    $region26: #{tpu_custom_call.1} parent=1 // pred_check
      _
    $region27: #{tpu_custom_call.1} parent=1 // pred_check_branch
      %35 = sbr.rel (0) target = $region29
    $region28: #{tpu_custom_call.1} parent=1 // pred_region
      %36 = dma.done [#allocation4], 8192
    $region29: #{tpu_custom_call.1} parent=1 // pred_fallthru
      _
    %v37 = vld [vmem:[#allocation3] sm:$0xff]
    %v38 = vld [vmem:[#allocation3 + $0x8] sm:$0xff]
    %v39 = vld [vmem:[#allocation3 + $0x10] sm:$0xff]
    %v40 = vld [vmem:[#allocation3 + $0x18] sm:$0xff]
    %v41 = vld [vmem:[#allocation3 + $0x20] sm:$0xff]
    %v42 = vld [vmem:[#allocation3 + $0x28] sm:$0xff]
    %v43 = vld [vmem:[#allocation3 + $0x30] sm:$0xff]
    %v44 = vld [vmem:[#allocation3 + $0x38] sm:$0xff]
    %v45 = vld [vmem:[#allocation3 + $0x40] sm:$0xff]
    %v46 = vld [vmem:[#allocation3 + $0x48] sm:$0xff]
    %v47 = vld [vmem:[#allocation3 + $0x50] sm:$0xff]
    %v48 = vld [vmem:[#allocation3 + $0x58] sm:$0xff]
    %v49 = vld [vmem:[#allocation3 + $0x60] sm:$0xff]
    %v50 = vld [vmem:[#allocation3 + $0x68] sm:$0xff]
    %v51 = vld [vmem:[#allocation3 + $0x70] sm:$0xff]
    %v52 = vld [vmem:[#allocation3 + $0x78] sm:$0xff]
    %v53 = vld [vmem:[#allocation3 + $0x80] sm:$0xff]
    %v54 = vld [vmem:[#allocation3 + $0x88] sm:$0xff]
    %v55 = vld [vmem:[#allocation3 + $0x90] sm:$0xff]
    %v56 = vld [vmem:[#allocation3 + $0x98] sm:$0xff]
    %v57 = vld [vmem:[#allocation3 + $0xa0] sm:$0xff]
    %v58 = vld [vmem:[#allocation3 + $0xa8] sm:$0xff]
    %v59 = vld [vmem:[#allocation3 + $0xb0] sm:$0xff]
    %v60 = vld [vmem:[#allocation3 + $0xb8] sm:$0xff]
    %v61 = vld [vmem:[#allocation3 + $0xc0] sm:$0xff]
    %v62 = vld [vmem:[#allocation3 + $0xc8] sm:$0xff]
    %v63 = vld [vmem:[#allocation3 + $0xd0] sm:$0xff]
    %v64 = vld [vmem:[#allocation3 + $0xd8] sm:$0xff]
    %v65 = vld [vmem:[#allocation3 + $0xe0] sm:$0xff]
    %v66 = vld [vmem:[#allocation3 + $0xe8] sm:$0xff]
    %v67 = vld [vmem:[#allocation3 + $0xf0] sm:$0xff]
    %v68 = vld [vmem:[#allocation3 + $0xf8] sm:$0xff]
    %v69 = vld [vmem:[#allocation3 + $0x100] sm:$0xff]
    %v70 = vld [vmem:[#allocation3 + $0x108] sm:$0xff]
    %v71 = vld [vmem:[#allocation3 + $0x110] sm:$0xff]
    %v72 = vld [vmem:[#allocation3 + $0x118] sm:$0xff]
    %v73 = vld [vmem:[#allocation3 + $0x120] sm:$0xff]
    %v74 = vld [vmem:[#allocation3 + $0x128] sm:$0xff]
    %v75 = vld [vmem:[#allocation3 + $0x130] sm:$0xff]
    %v76 = vld [vmem:[#allocation3 + $0x138] sm:$0xff]
    %v77 = vld [vmem:[#allocation3 + $0x140] sm:$0xff]
    %v78 = vld [vmem:[#allocation3 + $0x148] sm:$0xff]
    %v79 = vld [vmem:[#allocation3 + $0x150] sm:$0xff]
    %v80 = vld [vmem:[#allocation3 + $0x158] sm:$0xff]
    %v81 = vld [vmem:[#allocation3 + $0x160] sm:$0xff]
    %v82 = vld [vmem:[#allocation3 + $0x168] sm:$0xff]
    %v83 = vld [vmem:[#allocation3 + $0x170] sm:$0xff]
    %v84 = vld [vmem:[#allocation3 + $0x178] sm:$0xff]
    %v85 = vld [vmem:[#allocation3 + $0x180] sm:$0xff]
    %v86 = vld [vmem:[#allocation3 + $0x188] sm:$0xff]
    %v87 = vld [vmem:[#allocation3 + $0x190] sm:$0xff]
    %v88 = vld [vmem:[#allocation3 + $0x198] sm:$0xff]
    %v89 = vld [vmem:[#allocation3 + $0x1a0] sm:$0xff]
    %v90 = vld [vmem:[#allocation3 + $0x1a8] sm:$0xff]
    %v91 = vld [vmem:[#allocation3 + $0x1b0] sm:$0xff]
    %v92 = vld [vmem:[#allocation3 + $0x1b8] sm:$0xff]
    %v93 = vld [vmem:[#allocation3 + $0x1c0] sm:$0xff]
    %v94 = vld [vmem:[#allocation3 + $0x1c8] sm:$0xff]
    %v95 = vld [vmem:[#allocation3 + $0x1d0] sm:$0xff]
    %v96 = vld [vmem:[#allocation3 + $0x1d8] sm:$0xff]
    %v97 = vld [vmem:[#allocation3 + $0x1e0] sm:$0xff]
    %v98 = vld [vmem:[#allocation3 + $0x1e8] sm:$0xff]
    %v99 = vld [vmem:[#allocation3 + $0x1f0] sm:$0xff]
    %v100 = vld [vmem:[#allocation3 + $0x1f8] sm:$0xff]
    %v101 = vld [vmem:[%s0] sm:$0xff]
    %v102 = vld [vmem:[%s0 + $0x8] sm:$0xff]
    %v103 = vld [vmem:[%s0 + $0x10] sm:$0xff]
    %v104 = vld [vmem:[%s0 + $0x18] sm:$0xff]
    %v105 = vld [vmem:[%s0 + $0x20] sm:$0xff]
    %v106 = vld [vmem:[%s0 + $0x28] sm:$0xff]
    %v107 = vld [vmem:[%s0 + $0x30] sm:$0xff]
    %v108 = vld [vmem:[%s0 + $0x38] sm:$0xff]
    %v109 = vld [vmem:[%s1] sm:$0xff]
    %v110 = vld [vmem:[%s1 + $0x8] sm:$0xff]
    %v111 = vld [vmem:[%s1 + $0x10] sm:$0xff]
    %v112 = vld [vmem:[%s1 + $0x18] sm:$0xff]
    %v113 = vld [vmem:[%s2] sm:$0xf]
    %v115 = vlaneseq
    %v116 = vshrl.u32 %v115, 7
    %v117 = vsub.s32 0, %v116
    %v118 = vrot.slane %v113, %v117
    %v119 = vlaneseq
    %v120 = vshrl.u32 %v119, 7
    %v121 = vsub.s32 1, %v120
    %v122 = vrot.slane %v113, %v121
    %v123 = vlaneseq
    %v124 = vshrl.u32 %v123, 7
    %v125 = vsub.s32 2, %v124
    %v126 = vrot.slane %v113, %v125
    %v127 = vlaneseq
    %v128 = vshrl.u32 %v127, 7
    %v129 = vsub.s32 3, %v128
    %v130 = vrot.slane %v113, %v129
    %vm135 = vcmask 64512
    %v137 = vsel %vm135, %v101, 0
    %v140 = vsel %vm135, %v102, 0
    %v143 = vsel %vm135, %v103, 0
    %v146 = vsel %vm135, %v104, 0
    %v149 = vsel %vm135, %v105, 0
    %v152 = vsel %vm135, %v106, 0
    %v155 = vsel %vm135, %v107, 0
    %v158 = vsel %vm135, %v108, 0
    %160 = vmatprep.subr.mxu0 0.0
    %161 = vmatpush1.msra.mxu0 0.0
    %162 = vmatprep.subr.mxu0 0.0
    %163 = vmatpush1.msra.mxu0 0.0
    %164 = vmatprep.subr.mxu0 0.0
    %165 = vmatpush1.msra.mxu0 0.0
    %166 = vmatprep.subr.mxu0 0.0
    %167 = vmatpush1.msra.mxu0 0.0
    %168 = vmatprep.subr.mxu0 0.0
    %169 = vmatpush1.msra.mxu0 0.0
    %170 = vmatprep.subr.mxu0 0.0
    %171 = vmatpush1.msra.mxu0 0.0
    %172 = vmatprep.subr.mxu0 0.0
    %173 = vmatpush1.msra.mxu0 0.0
    %174 = vmatprep.subr.mxu0 0.0
    %175 = vmatpush1.msra.mxu0 0.0
    %176 = vmatprep.subr.mxu0 0.0
    %177 = vmatpush1.msra.mxu0 0.0
    %178 = vmatprep.subr.mxu0 0.0
    %179 = vmatpush1.msra.mxu0 0.0
    %180 = vmatprep.subr.mxu0 0.0
    %181 = vmatpush1.msra.mxu0 0.0
    %182 = vmatprep.subr.mxu0 0.0
    %183 = vmatpush1.msra.mxu0 0.0
    %184 = vmatprep.subr.mxu0 0.0
    %185 = vmatpush1.msra.mxu0 0.0
    %186 = vmatprep.subr.mxu0 0.0
    %187 = vmatpush1.msra.mxu0 0.0
    %188 = vmatprep.subr.mxu0 0.0
    %189 = vmatpush1.msra.mxu0 0.0
    %190 = vmatprep.subr.mxu0 %v110
    %191 = vmatpush1.msra.mxu0 %v109
    %192 = vmatprep.subr.mxu0 0.0
    %193 = vmatpush2.msra.mxu0 0.0
    %194 = vmatprep.subr.mxu0 0.0
    %195 = vmatpush2.msra.mxu0 0.0
    %196 = vmatprep.subr.mxu0 0.0
    %197 = vmatpush2.msra.mxu0 0.0
    %198 = vmatprep.subr.mxu0 0.0
    %199 = vmatpush2.msra.mxu0 0.0
    %200 = vmatprep.subr.mxu0 0.0
    %201 = vmatpush2.msra.mxu0 0.0
    %202 = vmatprep.subr.mxu0 0.0
    %203 = vmatpush2.msra.mxu0 0.0
    %204 = vmatprep.subr.mxu0 0.0
    %205 = vmatpush2.msra.mxu0 0.0
    %206 = vmatprep.subr.mxu0 0.0
    %207 = vmatpush2.msra.mxu0 0.0
    %208 = vmatprep.subr.mxu0 0.0
    %209 = vmatpush2.msra.mxu0 0.0
    %210 = vmatprep.subr.mxu0 0.0
    %211 = vmatpush2.msra.mxu0 0.0
    %212 = vmatprep.subr.mxu0 0.0
    %213 = vmatpush2.msra.mxu0 0.0
    %214 = vmatprep.subr.mxu0 0.0
    %215 = vmatpush2.msra.mxu0 0.0
    %216 = vmatprep.subr.mxu0 0.0
    %217 = vmatpush2.msra.mxu0 0.0
    %218 = vmatprep.subr.mxu0 0.0
    %219 = vmatpush2.msra.mxu0 0.0
    %220 = vmatprep.subr.mxu0 0.0
    %221 = vmatpush2.msra.mxu0 0.0
    %222 = vmatprep.subr.mxu0 0.0
    %223 = vmatpush2.msra.mxu0 0.0
    %224 = vmatprep.mubr.f32.mxu0 0.0
    %225 = vmatmul.mubr.f32.gmra.mxu0 %v137
    %v226 = vpop.f32.mrf.mxu0
    %v227 = vadd.f32 %v118, %v226
    %v228 = vpop.f32.mrf.mxu0
    %v229 = vadd.f32 %v122, %v228
    %230 = vmatprep.mubr.f32.mxu0 0.0
    %231 = vmatmul.mubr.f32.gmra.mxu0 %v140
    %v232 = vpop.f32.mrf.mxu0
    %v233 = vadd.f32 %v118, %v232
    %v234 = vpop.f32.mrf.mxu0
    %v235 = vadd.f32 %v122, %v234
    %236 = vmatprep.mubr.f32.mxu0 0.0
    %237 = vmatmul.mubr.f32.gmra.mxu0 %v143
    %v238 = vpop.f32.mrf.mxu0
    %v239 = vadd.f32 %v118, %v238
    %v240 = vpop.f32.mrf.mxu0
    %v241 = vadd.f32 %v122, %v240
    %242 = vmatprep.mubr.f32.mxu0 0.0
    %243 = vmatmul.mubr.f32.gmra.mxu0 %v146
    %v244 = vpop.f32.mrf.mxu0
    %v245 = vadd.f32 %v118, %v244
    %v246 = vpop.f32.mrf.mxu0
    %v247 = vadd.f32 %v122, %v246
    %248 = vmatprep.mubr.f32.mxu0 0.0
    %249 = vmatmul.mubr.f32.gmra.mxu0 %v149
    %v250 = vpop.f32.mrf.mxu0
    %v251 = vadd.f32 %v118, %v250
    %v252 = vpop.f32.mrf.mxu0
    %v253 = vadd.f32 %v122, %v252
    %254 = vmatprep.mubr.f32.mxu0 0.0
    %255 = vmatmul.mubr.f32.gmra.mxu0 %v152
    %v256 = vpop.f32.mrf.mxu0
    %v257 = vadd.f32 %v118, %v256
    %v258 = vpop.f32.mrf.mxu0
    %v259 = vadd.f32 %v122, %v258
    %260 = vmatprep.mubr.f32.mxu0 0.0
    %261 = vmatmul.mubr.f32.gmra.mxu0 %v155
    %v262 = vpop.f32.mrf.mxu0
    %v263 = vadd.f32 %v118, %v262
    %v264 = vpop.f32.mrf.mxu0
    %v265 = vadd.f32 %v122, %v264
    %266 = vmatprep.mubr.f32.mxu0 0.0
    %267 = vmatmul.mubr.f32.gmra.mxu0 %v158
    %v268 = vpop.f32.mrf.mxu0
    %v269 = vadd.f32 %v118, %v268
    %v270 = vpop.f32.mrf.mxu0
    %v271 = vadd.f32 %v122, %v270
    %272 = vdwg.mxu0
    %273 = vmatprep.subr.mxu0 0.0
    %274 = vmatpush1.msra.mxu0 0.0
    %275 = vmatprep.subr.mxu0 0.0
    %276 = vmatpush1.msra.mxu0 0.0
    %277 = vmatprep.subr.mxu0 0.0
    %278 = vmatpush1.msra.mxu0 0.0
    %279 = vmatprep.subr.mxu0 0.0
    %280 = vmatpush1.msra.mxu0 0.0
    %281 = vmatprep.subr.mxu0 0.0
    %282 = vmatpush1.msra.mxu0 0.0
    %283 = vmatprep.subr.mxu0 0.0
    %284 = vmatpush1.msra.mxu0 0.0
    %285 = vmatprep.subr.mxu0 0.0
    %286 = vmatpush1.msra.mxu0 0.0
    %287 = vmatprep.subr.mxu0 0.0
    %288 = vmatpush1.msra.mxu0 0.0
    %289 = vmatprep.subr.mxu0 0.0
    %290 = vmatpush1.msra.mxu0 0.0
    %291 = vmatprep.subr.mxu0 0.0
    %292 = vmatpush1.msra.mxu0 0.0
    %293 = vmatprep.subr.mxu0 0.0
    %294 = vmatpush1.msra.mxu0 0.0
    %295 = vmatprep.subr.mxu0 0.0
    %296 = vmatpush1.msra.mxu0 0.0
    %297 = vmatprep.subr.mxu0 0.0
    %298 = vmatpush1.msra.mxu0 0.0
    %299 = vmatprep.subr.mxu0 0.0
    %300 = vmatpush1.msra.mxu0 0.0
    %301 = vmatprep.subr.mxu0 0.0
    %302 = vmatpush1.msra.mxu0 0.0
    %303 = vmatprep.subr.mxu0 %v112
    %304 = vmatpush1.msra.mxu0 %v111
    %305 = vmatprep.subr.mxu0 0.0
    %306 = vmatpush2.msra.mxu0 0.0
    %307 = vmatprep.subr.mxu0 0.0
    %308 = vmatpush2.msra.mxu0 0.0
    %309 = vmatprep.subr.mxu0 0.0
    %310 = vmatpush2.msra.mxu0 0.0
    %311 = vmatprep.subr.mxu0 0.0
    %312 = vmatpush2.msra.mxu0 0.0
    %313 = vmatprep.subr.mxu0 0.0
    %314 = vmatpush2.msra.mxu0 0.0
    %315 = vmatprep.subr.mxu0 0.0
    %316 = vmatpush2.msra.mxu0 0.0
    %317 = vmatprep.subr.mxu0 0.0
    %318 = vmatpush2.msra.mxu0 0.0
    %319 = vmatprep.subr.mxu0 0.0
    %320 = vmatpush2.msra.mxu0 0.0
    %321 = vmatprep.subr.mxu0 0.0
    %322 = vmatpush2.msra.mxu0 0.0
    %323 = vmatprep.subr.mxu0 0.0
    %324 = vmatpush2.msra.mxu0 0.0
    %325 = vmatprep.subr.mxu0 0.0
    %326 = vmatpush2.msra.mxu0 0.0
    %327 = vmatprep.subr.mxu0 0.0
    %328 = vmatpush2.msra.mxu0 0.0
    %329 = vmatprep.subr.mxu0 0.0
    %330 = vmatpush2.msra.mxu0 0.0
    %331 = vmatprep.subr.mxu0 0.0
    %332 = vmatpush2.msra.mxu0 0.0
    %333 = vmatprep.subr.mxu0 0.0
    %334 = vmatpush2.msra.mxu0 0.0
    %335 = vmatprep.subr.mxu0 0.0
    %336 = vmatpush2.msra.mxu0 0.0
    %337 = vmatprep.mubr.f32.mxu0 0.0
    %338 = vmatmul.mubr.f32.gmra.mxu0 %v137
    %v339 = vpop.f32.mrf.mxu0
    %v340 = vadd.f32 %v126, %v339
    %v341 = vpop.f32.mrf.mxu0
    %v342 = vadd.f32 %v130, %v341
    %343 = vmatprep.mubr.f32.mxu0 0.0
    %344 = vmatmul.mubr.f32.gmra.mxu0 %v140
    %v345 = vpop.f32.mrf.mxu0
    %v346 = vadd.f32 %v126, %v345
    %v347 = vpop.f32.mrf.mxu0
    %v348 = vadd.f32 %v130, %v347
    %349 = vmatprep.mubr.f32.mxu0 0.0
    %350 = vmatmul.mubr.f32.gmra.mxu0 %v143
    %v351 = vpop.f32.mrf.mxu0
    %v352 = vadd.f32 %v126, %v351
    %v353 = vpop.f32.mrf.mxu0
    %v354 = vadd.f32 %v130, %v353
    %355 = vmatprep.mubr.f32.mxu0 0.0
    %356 = vmatmul.mubr.f32.gmra.mxu0 %v146
    %v357 = vpop.f32.mrf.mxu0
    %v358 = vadd.f32 %v126, %v357
    %v359 = vpop.f32.mrf.mxu0
    %v360 = vadd.f32 %v130, %v359
    %361 = vmatprep.mubr.f32.mxu0 0.0
    %362 = vmatmul.mubr.f32.gmra.mxu0 %v149
    %v363 = vpop.f32.mrf.mxu0
    %v364 = vadd.f32 %v126, %v363
    %v365 = vpop.f32.mrf.mxu0
    %v366 = vadd.f32 %v130, %v365
    %367 = vmatprep.mubr.f32.mxu0 0.0
    %368 = vmatmul.mubr.f32.gmra.mxu0 %v152
    %v369 = vpop.f32.mrf.mxu0
    %v370 = vadd.f32 %v126, %v369
    %v371 = vpop.f32.mrf.mxu0
    %v372 = vadd.f32 %v130, %v371
    %373 = vmatprep.mubr.f32.mxu0 0.0
    %374 = vmatmul.mubr.f32.gmra.mxu0 %v155
    %v375 = vpop.f32.mrf.mxu0
    %v376 = vadd.f32 %v126, %v375
    %v377 = vpop.f32.mrf.mxu0
    %v378 = vadd.f32 %v130, %v377
    %379 = vmatprep.mubr.f32.mxu0 0.0
    %380 = vmatmul.mubr.f32.gmra.mxu0 %v158
    %v381 = vpop.f32.mrf.mxu0
    %v382 = vadd.f32 %v126, %v381
    %v383 = vpop.f32.mrf.mxu0
    %v384 = vadd.f32 %v130, %v383
    %385 = vdwg.mxu0
    %386 = vst [vmem:[#allocation2] sm:$0xff] %v227
    %387 = vst [vmem:[#allocation2 + $0x8] sm:$0xff] %v229
    %388 = vst [vmem:[#allocation2 + $0x10] sm:$0xff] %v340
    %389 = vst [vmem:[#allocation2 + $0x18] sm:$0xff] %v342
    %390 = vst [vmem:[#allocation2 + $0x20] sm:$0xff] %v233
    %391 = vst [vmem:[#allocation2 + $0x28] sm:$0xff] %v235
    %392 = vst [vmem:[#allocation2 + $0x30] sm:$0xff] %v346
    %393 = vst [vmem:[#allocation2 + $0x38] sm:$0xff] %v348
    %394 = vst [vmem:[#allocation2 + $0x40] sm:$0xff] %v239
    %395 = vst [vmem:[#allocation2 + $0x48] sm:$0xff] %v241
    %396 = vst [vmem:[#allocation2 + $0x50] sm:$0xff] %v352
    %397 = vst [vmem:[#allocation2 + $0x58] sm:$0xff] %v354
    %398 = vst [vmem:[#allocation2 + $0x60] sm:$0xff] %v245
    %399 = vst [vmem:[#allocation2 + $0x68] sm:$0xff] %v247
    %400 = vst [vmem:[#allocation2 + $0x70] sm:$0xff] %v358
    %401 = vst [vmem:[#allocation2 + $0x78] sm:$0xff] %v360
    %402 = vst [vmem:[#allocation2 + $0x80] sm:$0xff] %v251
    %403 = vst [vmem:[#allocation2 + $0x88] sm:$0xff] %v253
    %404 = vst [vmem:[#allocation2 + $0x90] sm:$0xff] %v364
    %405 = vst [vmem:[#allocation2 + $0x98] sm:$0xff] %v366
    %406 = vst [vmem:[#allocation2 + $0xa0] sm:$0xff] %v257
    %407 = vst [vmem:[#allocation2 + $0xa8] sm:$0xff] %v259
    %408 = vst [vmem:[#allocation2 + $0xb0] sm:$0xff] %v370
    %409 = vst [vmem:[#allocation2 + $0xb8] sm:$0xff] %v372
    %410 = vst [vmem:[#allocation2 + $0xc0] sm:$0xff] %v263
    %411 = vst [vmem:[#allocation2 + $0xc8] sm:$0xff] %v265
    %412 = vst [vmem:[#allocation2 + $0xd0] sm:$0xff] %v376
    %413 = vst [vmem:[#allocation2 + $0xd8] sm:$0xff] %v378
    %414 = vst [vmem:[#allocation2 + $0xe0] sm:$0xff] %v269
    %415 = vst [vmem:[#allocation2 + $0xe8] sm:$0xff] %v271
    %416 = vst [vmem:[#allocation2 + $0xf0] sm:$0xff] %v382
    %417 = vst [vmem:[#allocation2 + $0xf8] sm:$0xff] %v384
    %v418 = vld [vmem:[#allocation2] sm:$0xff]
    %v419 = vld [vmem:[#allocation2 + $0x8] sm:$0xff]
    %v420 = vld [vmem:[#allocation2 + $0x10] sm:$0xff]
    %v421 = vld [vmem:[#allocation2 + $0x18] sm:$0xff]
    %v422 = vmul.f32 %v418, 0.5
    %v423 = vmul.f32 %v419, 0.5
    %v424 = vmul.f32 %v420, 0.5
    %v425 = vtanh.pop %v422
    %v426 = vtanh.pop %v423
    %v427 = vtanh.pop %v424
    %v428 = vadd.f32 %v425, 1.0
    %v429 = vadd.f32 %v426, 1.0
    %v430 = vadd.f32 %v427, 1.0
    %v431 = vmul.f32 %v428, 0.5
    %v432 = vmul.f32 %v429, 0.5
    %v433 = vmul.f32 %v430, 0.5
    %v434 = vtanh.pop %v421
    %v435 = vmul.f32 %v432, 0.0
    %v436 = vmul.f32 %v431, %v434
    %v437 = vadd.f32 %v435, %v436
    %v438 = vtanh.pop %v437
    %v439 = vmul.f32 %v433, %v438
    %v440 = vlaneseq
    %v441 = vand.u32 %v440, 127
    %vm442 = vcmp.lt.s32.totalorder %v441, 64
    %v443 = vsel %vm442, 1, 0
    %v444 = vcvt.s32.f32 %v443
    %v445 = vmul.f32 %v439, %v444
    %v446 = vmul.f32 %v437, %v444
    %s447 = smul.u32 1, 4
    %s448 = smul.addr %s447, 8
    %s449 = scalar_lea.vmem [#allocation2], %s448
    %v450 = vld [vmem:[%s449] sm:$0xff]
    %v451 = vld [vmem:[%s449 + $0x8] sm:$0xff]
    %v452 = vld [vmem:[%s449 + $0x10] sm:$0xff]
    %v453 = vld [vmem:[%s449 + $0x18] sm:$0xff]
    %454 = vmatprep.subr.mxu0 %v98
    %455 = vmatpush1.msra.mxu0 %v97
    %456 = vmatprep.subr.mxu0 %v94
    %457 = vmatpush1.msra.mxu0 %v93
    %458 = vmatprep.subr.mxu0 %v90
    %459 = vmatpush1.msra.mxu0 %v89
    %460 = vmatprep.subr.mxu0 %v86
    %461 = vmatpush1.msra.mxu0 %v85
    %462 = vmatprep.subr.mxu0 %v82
    %463 = vmatpush1.msra.mxu0 %v81
    %464 = vmatprep.subr.mxu0 %v78
    %465 = vmatpush1.msra.mxu0 %v77
    %466 = vmatprep.subr.mxu0 %v74
    %467 = vmatpush1.msra.mxu0 %v73
    %468 = vmatprep.subr.mxu0 %v70
    %469 = vmatpush1.msra.mxu0 %v69
    %470 = vmatprep.subr.mxu0 %v66
    %471 = vmatpush1.msra.mxu0 %v65
    %472 = vmatprep.subr.mxu0 %v62
    %473 = vmatpush1.msra.mxu0 %v61
    %474 = vmatprep.subr.mxu0 %v58
    %475 = vmatpush1.msra.mxu0 %v57
    %476 = vmatprep.subr.mxu0 %v54
    %477 = vmatpush1.msra.mxu0 %v53
    %478 = vmatprep.subr.mxu0 %v50
    %479 = vmatpush1.msra.mxu0 %v49
    %480 = vmatprep.subr.mxu0 %v46
    %481 = vmatpush1.msra.mxu0 %v45
    %482 = vmatprep.subr.mxu0 %v42
    %483 = vmatpush1.msra.mxu0 %v41
    %484 = vmatprep.subr.mxu0 %v38
    %485 = vmatpush1.msra.mxu0 %v37
    %486 = vmatprep.subr.mxu0 0.0
    %487 = vmatpush2.msra.mxu0 0.0
    %488 = vmatprep.subr.mxu0 0.0
    %489 = vmatpush2.msra.mxu0 0.0
    %490 = vmatprep.subr.mxu0 0.0
    %491 = vmatpush2.msra.mxu0 0.0
    %492 = vmatprep.subr.mxu0 0.0
    %493 = vmatpush2.msra.mxu0 0.0
    %494 = vmatprep.subr.mxu0 0.0
    %495 = vmatpush2.msra.mxu0 0.0
    %496 = vmatprep.subr.mxu0 0.0
    %497 = vmatpush2.msra.mxu0 0.0
    %498 = vmatprep.subr.mxu0 0.0
    %499 = vmatpush2.msra.mxu0 0.0
    %500 = vmatprep.subr.mxu0 0.0
    %501 = vmatpush2.msra.mxu0 0.0
    %502 = vmatprep.subr.mxu0 0.0
    %503 = vmatpush2.msra.mxu0 0.0
    %504 = vmatprep.subr.mxu0 0.0
    %505 = vmatpush2.msra.mxu0 0.0
    %506 = vmatprep.subr.mxu0 0.0
    %507 = vmatpush2.msra.mxu0 0.0
    %508 = vmatprep.subr.mxu0 0.0
    %509 = vmatpush2.msra.mxu0 0.0
    %510 = vmatprep.subr.mxu0 0.0
    %511 = vmatpush2.msra.mxu0 0.0
    %512 = vmatprep.subr.mxu0 0.0
    %513 = vmatpush2.msra.mxu0 0.0
    %514 = vmatprep.subr.mxu0 0.0
    %515 = vmatpush2.msra.mxu0 0.0
    %516 = vmatprep.subr.mxu0 0.0
    %517 = vmatpush2.msra.mxu0 0.0
    %518 = vmatprep.mubr.f32.mxu0 0.0
    %519 = vmatmul.mubr.f32.gmra.mxu0 %v445
    %v520 = vpop.f32.mrf.mxu0
    %v521 = vadd.f32 0.0, %v520
    %v522 = vpop.f32.mrf.mxu0
    %v523 = vadd.f32 0.0, %v522
    %524 = vdwg.mxu0
    %525 = vmatprep.subr.mxu0 %v100
    %526 = vmatpush1.msra.mxu0 %v99
    %527 = vmatprep.subr.mxu0 %v96
    %528 = vmatpush1.msra.mxu0 %v95
    %529 = vmatprep.subr.mxu0 %v92
    %530 = vmatpush1.msra.mxu0 %v91
    %531 = vmatprep.subr.mxu0 %v88
    %532 = vmatpush1.msra.mxu0 %v87
    %533 = vmatprep.subr.mxu0 %v84
    %534 = vmatpush1.msra.mxu0 %v83
    %535 = vmatprep.subr.mxu0 %v80
    %536 = vmatpush1.msra.mxu0 %v79
    %537 = vmatprep.subr.mxu0 %v76
    %538 = vmatpush1.msra.mxu0 %v75
    %539 = vmatprep.subr.mxu0 %v72
    %540 = vmatpush1.msra.mxu0 %v71
    %541 = vmatprep.subr.mxu0 %v68
    %542 = vmatpush1.msra.mxu0 %v67
    %543 = vmatprep.subr.mxu0 %v64
    %544 = vmatpush1.msra.mxu0 %v63
    %545 = vmatprep.subr.mxu0 %v60
    %546 = vmatpush1.msra.mxu0 %v59
    %547 = vmatprep.subr.mxu0 %v56
    %548 = vmatpush1.msra.mxu0 %v55
    %549 = vmatprep.subr.mxu0 %v52
    %550 = vmatpush1.msra.mxu0 %v51
    %551 = vmatprep.subr.mxu0 %v48
    %552 = vmatpush1.msra.mxu0 %v47
    %553 = vmatprep.subr.mxu0 %v44
    %554 = vmatpush1.msra.mxu0 %v43
    %555 = vmatprep.subr.mxu0 %v40
    %556 = vmatpush1.msra.mxu0 %v39
    %557 = vmatprep.subr.mxu0 0.0
    %558 = vmatpush2.msra.mxu0 0.0
    %559 = vmatprep.subr.mxu0 0.0
    %560 = vmatpush2.msra.mxu0 0.0
    %561 = vmatprep.subr.mxu0 0.0
    %562 = vmatpush2.msra.mxu0 0.0
    %563 = vmatprep.subr.mxu0 0.0
    %564 = vmatpush2.msra.mxu0 0.0
    %565 = vmatprep.subr.mxu0 0.0
    %566 = vmatpush2.msra.mxu0 0.0
    %567 = vmatprep.subr.mxu0 0.0
    %568 = vmatpush2.msra.mxu0 0.0
    %569 = vmatprep.subr.mxu0 0.0
    %570 = vmatpush2.msra.mxu0 0.0
    %571 = vmatprep.subr.mxu0 0.0
    %572 = vmatpush2.msra.mxu0 0.0
    %573 = vmatprep.subr.mxu0 0.0
    %574 = vmatpush2.msra.mxu0 0.0
    %575 = vmatprep.subr.mxu0 0.0
    %576 = vmatpush2.msra.mxu0 0.0
    %577 = vmatprep.subr.mxu0 0.0
    %578 = vmatpush2.msra.mxu0 0.0
    %579 = vmatprep.subr.mxu0 0.0
    %580 = vmatpush2.msra.mxu0 0.0
    %581 = vmatprep.subr.mxu0 0.0
    %582 = vmatpush2.msra.mxu0 0.0
    %583 = vmatprep.subr.mxu0 0.0
    %584 = vmatpush2.msra.mxu0 0.0
    %585 = vmatprep.subr.mxu0 0.0
    %586 = vmatpush2.msra.mxu0 0.0
    %587 = vmatprep.subr.mxu0 0.0
    %588 = vmatpush2.msra.mxu0 0.0
    %589 = vmatprep.mubr.f32.mxu0 0.0
    %590 = vmatmul.mubr.f32.gmra.mxu0 %v445
    %v591 = vpop.f32.mrf.mxu0
    %v592 = vadd.f32 0.0, %v591
    %v593 = vpop.f32.mrf.mxu0
    %v594 = vadd.f32 0.0, %v593
    %595 = vdwg.mxu0
    %v596 = vadd.f32 %v450, %v521
    %v597 = vadd.f32 %v451, %v523
    %v598 = vadd.f32 %v452, %v592
    %v599 = vadd.f32 %v453, %v594
    %v600 = vmul.f32 %v596, 0.5
    %v601 = vmul.f32 %v597, 0.5
    %v602 = vmul.f32 %v598, 0.5
    %v603 = vtanh.pop %v600
    %v604 = vtanh.pop %v601
    %v605 = vtanh.pop %v602
    %v606 = vadd.f32 %v603, 1.0
    %v607 = vadd.f32 %v604, 1.0
    %v608 = vadd.f32 %v605, 1.0
    %v609 = vmul.f32 %v606, 0.5
    %v610 = vmul.f32 %v607, 0.5
    %v611 = vmul.f32 %v608, 0.5
    %v612 = vtanh.pop %v599
    %v613 = vmul.f32 %v610, %v446
    %v614 = vmul.f32 %v609, %v612
    %v615 = vadd.f32 %v613, %v614
    %v616 = vtanh.pop %v615
    %v617 = vmul.f32 %v611, %v616
    %s618 = smul.u32 2, 4
    %s619 = smul.addr %s618, 8
    %s620 = scalar_lea.vmem [#allocation2], %s619
    %v621 = vld [vmem:[%s620] sm:$0xff]
    %v622 = vld [vmem:[%s620 + $0x8] sm:$0xff]
    %v623 = vld [vmem:[%s620 + $0x10] sm:$0xff]
    %v624 = vld [vmem:[%s620 + $0x18] sm:$0xff]
    %625 = vmatprep.subr.mxu0 %v98
    %626 = vmatpush1.msra.mxu0 %v97
    %627 = vmatprep.subr.mxu0 %v94
    %628 = vmatpush1.msra.mxu0 %v93
    %629 = vmatprep.subr.mxu0 %v90
    %630 = vmatpush1.msra.mxu0 %v89
    %631 = vmatprep.subr.mxu0 %v86
    %632 = vmatpush1.msra.mxu0 %v85
    %633 = vmatprep.subr.mxu0 %v82
    %634 = vmatpush1.msra.mxu0 %v81
    %635 = vmatprep.subr.mxu0 %v78
    %636 = vmatpush1.msra.mxu0 %v77
    %637 = vmatprep.subr.mxu0 %v74
    %638 = vmatpush1.msra.mxu0 %v73
    %639 = vmatprep.subr.mxu0 %v70
    %640 = vmatpush1.msra.mxu0 %v69
    %641 = vmatprep.subr.mxu0 %v66
    %642 = vmatpush1.msra.mxu0 %v65
    %643 = vmatprep.subr.mxu0 %v62
    %644 = vmatpush1.msra.mxu0 %v61
    %645 = vmatprep.subr.mxu0 %v58
    %646 = vmatpush1.msra.mxu0 %v57
    %647 = vmatprep.subr.mxu0 %v54
    %648 = vmatpush1.msra.mxu0 %v53
    %649 = vmatprep.subr.mxu0 %v50
    %650 = vmatpush1.msra.mxu0 %v49
    %651 = vmatprep.subr.mxu0 %v46
    %652 = vmatpush1.msra.mxu0 %v45
    %653 = vmatprep.subr.mxu0 %v42
    %654 = vmatpush1.msra.mxu0 %v41
    %655 = vmatprep.subr.mxu0 %v38
    %656 = vmatpush1.msra.mxu0 %v37
    %657 = vmatprep.subr.mxu0 0.0
    %658 = vmatpush2.msra.mxu0 0.0
    %659 = vmatprep.subr.mxu0 0.0
    %660 = vmatpush2.msra.mxu0 0.0
    %661 = vmatprep.subr.mxu0 0.0
    %662 = vmatpush2.msra.mxu0 0.0
    %663 = vmatprep.subr.mxu0 0.0
    %664 = vmatpush2.msra.mxu0 0.0
    %665 = vmatprep.subr.mxu0 0.0
    %666 = vmatpush2.msra.mxu0 0.0
    %667 = vmatprep.subr.mxu0 0.0
    %668 = vmatpush2.msra.mxu0 0.0
    %669 = vmatprep.subr.mxu0 0.0
    %670 = vmatpush2.msra.mxu0 0.0
    %671 = vmatprep.subr.mxu0 0.0
    %672 = vmatpush2.msra.mxu0 0.0
    %673 = vmatprep.subr.mxu0 0.0
    %674 = vmatpush2.msra.mxu0 0.0
    %675 = vmatprep.subr.mxu0 0.0
    %676 = vmatpush2.msra.mxu0 0.0
    %677 = vmatprep.subr.mxu0 0.0
    %678 = vmatpush2.msra.mxu0 0.0
    %679 = vmatprep.subr.mxu0 0.0
    %680 = vmatpush2.msra.mxu0 0.0
    %681 = vmatprep.subr.mxu0 0.0
    %682 = vmatpush2.msra.mxu0 0.0
    %683 = vmatprep.subr.mxu0 0.0
    %684 = vmatpush2.msra.mxu0 0.0
    %685 = vmatprep.subr.mxu0 0.0
    %686 = vmatpush2.msra.mxu0 0.0
    %687 = vmatprep.subr.mxu0 0.0
    %688 = vmatpush2.msra.mxu0 0.0
    %689 = vmatprep.mubr.f32.mxu0 0.0
    %690 = vmatmul.mubr.f32.gmra.mxu0 %v617
    %v691 = vpop.f32.mrf.mxu0
    %v692 = vadd.f32 0.0, %v691
    %v693 = vpop.f32.mrf.mxu0
    %v694 = vadd.f32 0.0, %v693
    %695 = vdwg.mxu0
    %696 = vmatprep.subr.mxu0 %v100
    %697 = vmatpush1.msra.mxu0 %v99
    %698 = vmatprep.subr.mxu0 %v96
    %699 = vmatpush1.msra.mxu0 %v95
    %700 = vmatprep.subr.mxu0 %v92
    %701 = vmatpush1.msra.mxu0 %v91
    %702 = vmatprep.subr.mxu0 %v88
    %703 = vmatpush1.msra.mxu0 %v87
    %704 = vmatprep.subr.mxu0 %v84
    %705 = vmatpush1.msra.mxu0 %v83
    %706 = vmatprep.subr.mxu0 %v80
    %707 = vmatpush1.msra.mxu0 %v79
    %708 = vmatprep.subr.mxu0 %v76
    %709 = vmatpush1.msra.mxu0 %v75
    %710 = vmatprep.subr.mxu0 %v72
    %711 = vmatpush1.msra.mxu0 %v71
    %712 = vmatprep.subr.mxu0 %v68
    %713 = vmatpush1.msra.mxu0 %v67
    %714 = vmatprep.subr.mxu0 %v64
    %715 = vmatpush1.msra.mxu0 %v63
    %716 = vmatprep.subr.mxu0 %v60
    %717 = vmatpush1.msra.mxu0 %v59
    %718 = vmatprep.subr.mxu0 %v56
    %719 = vmatpush1.msra.mxu0 %v55
    %720 = vmatprep.subr.mxu0 %v52
    %721 = vmatpush1.msra.mxu0 %v51
    %722 = vmatprep.subr.mxu0 %v48
    %723 = vmatpush1.msra.mxu0 %v47
    %724 = vmatprep.subr.mxu0 %v44
    %725 = vmatpush1.msra.mxu0 %v43
    %726 = vmatprep.subr.mxu0 %v40
    %727 = vmatpush1.msra.mxu0 %v39
    %728 = vmatprep.subr.mxu0 0.0
    %729 = vmatpush2.msra.mxu0 0.0
    %730 = vmatprep.subr.mxu0 0.0
    %731 = vmatpush2.msra.mxu0 0.0
    %732 = vmatprep.subr.mxu0 0.0
    %733 = vmatpush2.msra.mxu0 0.0
    %734 = vmatprep.subr.mxu0 0.0
    %735 = vmatpush2.msra.mxu0 0.0
    %736 = vmatprep.subr.mxu0 0.0
    %737 = vmatpush2.msra.mxu0 0.0
    %738 = vmatprep.subr.mxu0 0.0
    %739 = vmatpush2.msra.mxu0 0.0
    %740 = vmatprep.subr.mxu0 0.0
    %741 = vmatpush2.msra.mxu0 0.0
    %742 = vmatprep.subr.mxu0 0.0
    %743 = vmatpush2.msra.mxu0 0.0
    %744 = vmatprep.subr.mxu0 0.0
    %745 = vmatpush2.msra.mxu0 0.0
    %746 = vmatprep.subr.mxu0 0.0
    %747 = vmatpush2.msra.mxu0 0.0
    %748 = vmatprep.subr.mxu0 0.0
    %749 = vmatpush2.msra.mxu0 0.0
    %750 = vmatprep.subr.mxu0 0.0
    %751 = vmatpush2.msra.mxu0 0.0
    %752 = vmatprep.subr.mxu0 0.0
    %753 = vmatpush2.msra.mxu0 0.0
    %754 = vmatprep.subr.mxu0 0.0
    %755 = vmatpush2.msra.mxu0 0.0
    %756 = vmatprep.subr.mxu0 0.0
    %757 = vmatpush2.msra.mxu0 0.0
    %758 = vmatprep.subr.mxu0 0.0
    %759 = vmatpush2.msra.mxu0 0.0
    %760 = vmatprep.mubr.f32.mxu0 0.0
    %761 = vmatmul.mubr.f32.gmra.mxu0 %v617
    %v762 = vpop.f32.mrf.mxu0
    %v763 = vadd.f32 0.0, %v762
    %v764 = vpop.f32.mrf.mxu0
    %v765 = vadd.f32 0.0, %v764
    %766 = vdwg.mxu0
    %v767 = vadd.f32 %v621, %v692
    %v768 = vadd.f32 %v622, %v694
    %v769 = vadd.f32 %v623, %v763
    %v770 = vadd.f32 %v624, %v765
    %v771 = vmul.f32 %v767, 0.5
    %v772 = vmul.f32 %v768, 0.5
    %v773 = vmul.f32 %v769, 0.5
    %v774 = vtanh.pop %v771
    %v775 = vtanh.pop %v772
    %v776 = vtanh.pop %v773
    %v777 = vadd.f32 %v774, 1.0
    %v778 = vadd.f32 %v775, 1.0
    %v779 = vadd.f32 %v776, 1.0
    %v780 = vmul.f32 %v777, 0.5
    %v781 = vmul.f32 %v778, 0.5
    %v782 = vmul.f32 %v779, 0.5
    %v783 = vtanh.pop %v770
    %v784 = vmul.f32 %v781, %v615
    %v785 = vmul.f32 %v780, %v783
    %v786 = vadd.f32 %v784, %v785
    %v787 = vtanh.pop %v786
    %v788 = vmul.f32 %v782, %v787
    %s789 = smul.u32 3, 4
    %s790 = smul.addr %s789, 8
    %s791 = scalar_lea.vmem [#allocation2], %s790
    %v792 = vld [vmem:[%s791] sm:$0xff]
    %v793 = vld [vmem:[%s791 + $0x8] sm:$0xff]
    %v794 = vld [vmem:[%s791 + $0x10] sm:$0xff]
    %v795 = vld [vmem:[%s791 + $0x18] sm:$0xff]
    %796 = vmatprep.subr.mxu0 %v98
    %797 = vmatpush1.msra.mxu0 %v97
    %798 = vmatprep.subr.mxu0 %v94
    %799 = vmatpush1.msra.mxu0 %v93
    %800 = vmatprep.subr.mxu0 %v90
    %801 = vmatpush1.msra.mxu0 %v89
    %802 = vmatprep.subr.mxu0 %v86
    %803 = vmatpush1.msra.mxu0 %v85
    %804 = vmatprep.subr.mxu0 %v82
    %805 = vmatpush1.msra.mxu0 %v81
    %806 = vmatprep.subr.mxu0 %v78
    %807 = vmatpush1.msra.mxu0 %v77
    %808 = vmatprep.subr.mxu0 %v74
    %809 = vmatpush1.msra.mxu0 %v73
    %810 = vmatprep.subr.mxu0 %v70
    %811 = vmatpush1.msra.mxu0 %v69
    %812 = vmatprep.subr.mxu0 %v66
    %813 = vmatpush1.msra.mxu0 %v65
    %814 = vmatprep.subr.mxu0 %v62
    %815 = vmatpush1.msra.mxu0 %v61
    %816 = vmatprep.subr.mxu0 %v58
    %817 = vmatpush1.msra.mxu0 %v57
    %818 = vmatprep.subr.mxu0 %v54
    %819 = vmatpush1.msra.mxu0 %v53
    %820 = vmatprep.subr.mxu0 %v50
    %821 = vmatpush1.msra.mxu0 %v49
    %822 = vmatprep.subr.mxu0 %v46
    %823 = vmatpush1.msra.mxu0 %v45
    %824 = vmatprep.subr.mxu0 %v42
    %825 = vmatpush1.msra.mxu0 %v41
    %826 = vmatprep.subr.mxu0 %v38
    %827 = vmatpush1.msra.mxu0 %v37
    %828 = vmatprep.subr.mxu0 0.0
    %829 = vmatpush2.msra.mxu0 0.0
    %830 = vmatprep.subr.mxu0 0.0
    %831 = vmatpush2.msra.mxu0 0.0
    %832 = vmatprep.subr.mxu0 0.0
    %833 = vmatpush2.msra.mxu0 0.0
    %834 = vmatprep.subr.mxu0 0.0
    %835 = vmatpush2.msra.mxu0 0.0
    %836 = vmatprep.subr.mxu0 0.0
    %837 = vmatpush2.msra.mxu0 0.0
    %838 = vmatprep.subr.mxu0 0.0
    %839 = vmatpush2.msra.mxu0 0.0
    %840 = vmatprep.subr.mxu0 0.0
    %841 = vmatpush2.msra.mxu0 0.0
    %842 = vmatprep.subr.mxu0 0.0
    %843 = vmatpush2.msra.mxu0 0.0
    %844 = vmatprep.subr.mxu0 0.0
    %845 = vmatpush2.msra.mxu0 0.0
    %846 = vmatprep.subr.mxu0 0.0
    %847 = vmatpush2.msra.mxu0 0.0
    %848 = vmatprep.subr.mxu0 0.0
    %849 = vmatpush2.msra.mxu0 0.0
    %850 = vmatprep.subr.mxu0 0.0
    %851 = vmatpush2.msra.mxu0 0.0
    %852 = vmatprep.subr.mxu0 0.0
    %853 = vmatpush2.msra.mxu0 0.0
    %854 = vmatprep.subr.mxu0 0.0
    %855 = vmatpush2.msra.mxu0 0.0
    %856 = vmatprep.subr.mxu0 0.0
    %857 = vmatpush2.msra.mxu0 0.0
    %858 = vmatprep.subr.mxu0 0.0
    %859 = vmatpush2.msra.mxu0 0.0
    %860 = vmatprep.mubr.f32.mxu0 0.0
    %861 = vmatmul.mubr.f32.gmra.mxu0 %v788
    %v862 = vpop.f32.mrf.mxu0
    %v863 = vadd.f32 0.0, %v862
    %v864 = vpop.f32.mrf.mxu0
    %v865 = vadd.f32 0.0, %v864
    %866 = vdwg.mxu0
    %867 = vmatprep.subr.mxu0 %v100
    %868 = vmatpush1.msra.mxu0 %v99
    %869 = vmatprep.subr.mxu0 %v96
    %870 = vmatpush1.msra.mxu0 %v95
    %871 = vmatprep.subr.mxu0 %v92
    %872 = vmatpush1.msra.mxu0 %v91
    %873 = vmatprep.subr.mxu0 %v88
    %874 = vmatpush1.msra.mxu0 %v87
    %875 = vmatprep.subr.mxu0 %v84
    %876 = vmatpush1.msra.mxu0 %v83
    %877 = vmatprep.subr.mxu0 %v80
    %878 = vmatpush1.msra.mxu0 %v79
    %879 = vmatprep.subr.mxu0 %v76
    %880 = vmatpush1.msra.mxu0 %v75
    %881 = vmatprep.subr.mxu0 %v72
    %882 = vmatpush1.msra.mxu0 %v71
    %883 = vmatprep.subr.mxu0 %v68
    %884 = vmatpush1.msra.mxu0 %v67
    %885 = vmatprep.subr.mxu0 %v64
    %886 = vmatpush1.msra.mxu0 %v63
    %887 = vmatprep.subr.mxu0 %v60
    %888 = vmatpush1.msra.mxu0 %v59
    %889 = vmatprep.subr.mxu0 %v56
    %890 = vmatpush1.msra.mxu0 %v55
    %891 = vmatprep.subr.mxu0 %v52
    %892 = vmatpush1.msra.mxu0 %v51
    %893 = vmatprep.subr.mxu0 %v48
    %894 = vmatpush1.msra.mxu0 %v47
    %895 = vmatprep.subr.mxu0 %v44
    %896 = vmatpush1.msra.mxu0 %v43
    %897 = vmatprep.subr.mxu0 %v40
    %898 = vmatpush1.msra.mxu0 %v39
    %899 = vmatprep.subr.mxu0 0.0
    %900 = vmatpush2.msra.mxu0 0.0
    %901 = vmatprep.subr.mxu0 0.0
    %902 = vmatpush2.msra.mxu0 0.0
    %903 = vmatprep.subr.mxu0 0.0
    %904 = vmatpush2.msra.mxu0 0.0
    %905 = vmatprep.subr.mxu0 0.0
    %906 = vmatpush2.msra.mxu0 0.0
    %907 = vmatprep.subr.mxu0 0.0
    %908 = vmatpush2.msra.mxu0 0.0
    %909 = vmatprep.subr.mxu0 0.0
    %910 = vmatpush2.msra.mxu0 0.0
    %911 = vmatprep.subr.mxu0 0.0
    %912 = vmatpush2.msra.mxu0 0.0
    %913 = vmatprep.subr.mxu0 0.0
    %914 = vmatpush2.msra.mxu0 0.0
    %915 = vmatprep.subr.mxu0 0.0
    %916 = vmatpush2.msra.mxu0 0.0
    %917 = vmatprep.subr.mxu0 0.0
    %918 = vmatpush2.msra.mxu0 0.0
    %919 = vmatprep.subr.mxu0 0.0
    %920 = vmatpush2.msra.mxu0 0.0
    %921 = vmatprep.subr.mxu0 0.0
    %922 = vmatpush2.msra.mxu0 0.0
    %923 = vmatprep.subr.mxu0 0.0
    %924 = vmatpush2.msra.mxu0 0.0
    %925 = vmatprep.subr.mxu0 0.0
    %926 = vmatpush2.msra.mxu0 0.0
    %927 = vmatprep.subr.mxu0 0.0
    %928 = vmatpush2.msra.mxu0 0.0
    %929 = vmatprep.subr.mxu0 0.0
    %930 = vmatpush2.msra.mxu0 0.0
    %931 = vmatprep.mubr.f32.mxu0 0.0
    %932 = vmatmul.mubr.f32.gmra.mxu0 %v788
    %v933 = vpop.f32.mrf.mxu0
    %v934 = vadd.f32 0.0, %v933
    %v935 = vpop.f32.mrf.mxu0
    %v936 = vadd.f32 0.0, %v935
    %937 = vdwg.mxu0
    %v938 = vadd.f32 %v792, %v863
    %v939 = vadd.f32 %v793, %v865
    %v940 = vadd.f32 %v794, %v934
    %v941 = vadd.f32 %v795, %v936
    %v942 = vmul.f32 %v938, 0.5
    %v943 = vmul.f32 %v939, 0.5
    %v944 = vmul.f32 %v940, 0.5
    %v945 = vtanh.pop %v942
    %v946 = vtanh.pop %v943
    %v947 = vtanh.pop %v944
    %v948 = vadd.f32 %v945, 1.0
    %v949 = vadd.f32 %v946, 1.0
    %v950 = vadd.f32 %v947, 1.0
    %v951 = vmul.f32 %v948, 0.5
    %v952 = vmul.f32 %v949, 0.5
    %v953 = vmul.f32 %v950, 0.5
    %v954 = vtanh.pop %v941
    %v955 = vmul.f32 %v952, %v786
    %v956 = vmul.f32 %v951, %v954
    %v957 = vadd.f32 %v955, %v956
    %v958 = vtanh.pop %v957
    %v959 = vmul.f32 %v953, %v958
    %s960 = smul.u32 4, 4
    %s961 = smul.addr %s960, 8
    %s962 = scalar_lea.vmem [#allocation2], %s961
    %v963 = vld [vmem:[%s962] sm:$0xff]
    %v964 = vld [vmem:[%s962 + $0x8] sm:$0xff]
    %v965 = vld [vmem:[%s962 + $0x10] sm:$0xff]
    %v966 = vld [vmem:[%s962 + $0x18] sm:$0xff]
    %967 = vmatprep.subr.mxu0 %v98
    %968 = vmatpush1.msra.mxu0 %v97
    %969 = vmatprep.subr.mxu0 %v94
    %970 = vmatpush1.msra.mxu0 %v93
    %971 = vmatprep.subr.mxu0 %v90
    %972 = vmatpush1.msra.mxu0 %v89
    %973 = vmatprep.subr.mxu0 %v86
    %974 = vmatpush1.msra.mxu0 %v85
    %975 = vmatprep.subr.mxu0 %v82
    %976 = vmatpush1.msra.mxu0 %v81
    %977 = vmatprep.subr.mxu0 %v78
    %978 = vmatpush1.msra.mxu0 %v77
    %979 = vmatprep.subr.mxu0 %v74
    %980 = vmatpush1.msra.mxu0 %v73
    %981 = vmatprep.subr.mxu0 %v70
    %982 = vmatpush1.msra.mxu0 %v69
    %983 = vmatprep.subr.mxu0 %v66
    %984 = vmatpush1.msra.mxu0 %v65
    %985 = vmatprep.subr.mxu0 %v62
    %986 = vmatpush1.msra.mxu0 %v61
    %987 = vmatprep.subr.mxu0 %v58
    %988 = vmatpush1.msra.mxu0 %v57
    %989 = vmatprep.subr.mxu0 %v54
    %990 = vmatpush1.msra.mxu0 %v53
    %991 = vmatprep.subr.mxu0 %v50
    %992 = vmatpush1.msra.mxu0 %v49
    %993 = vmatprep.subr.mxu0 %v46
    %994 = vmatpush1.msra.mxu0 %v45
    %995 = vmatprep.subr.mxu0 %v42
    %996 = vmatpush1.msra.mxu0 %v41
    %997 = vmatprep.subr.mxu0 %v38
    %998 = vmatpush1.msra.mxu0 %v37
    %999 = vmatprep.subr.mxu0 0.0
    %1000 = vmatpush2.msra.mxu0 0.0
    %1001 = vmatprep.subr.mxu0 0.0
    %1002 = vmatpush2.msra.mxu0 0.0
    %1003 = vmatprep.subr.mxu0 0.0
    %1004 = vmatpush2.msra.mxu0 0.0
    %1005 = vmatprep.subr.mxu0 0.0
    %1006 = vmatpush2.msra.mxu0 0.0
    %1007 = vmatprep.subr.mxu0 0.0
    %1008 = vmatpush2.msra.mxu0 0.0
    %1009 = vmatprep.subr.mxu0 0.0
    %1010 = vmatpush2.msra.mxu0 0.0
    %1011 = vmatprep.subr.mxu0 0.0
    %1012 = vmatpush2.msra.mxu0 0.0
    %1013 = vmatprep.subr.mxu0 0.0
    %1014 = vmatpush2.msra.mxu0 0.0
    %1015 = vmatprep.subr.mxu0 0.0
    %1016 = vmatpush2.msra.mxu0 0.0
    %1017 = vmatprep.subr.mxu0 0.0
    %1018 = vmatpush2.msra.mxu0 0.0
    %1019 = vmatprep.subr.mxu0 0.0
    %1020 = vmatpush2.msra.mxu0 0.0
    %1021 = vmatprep.subr.mxu0 0.0
    %1022 = vmatpush2.msra.mxu0 0.0
    %1023 = vmatprep.subr.mxu0 0.0
    %1024 = vmatpush2.msra.mxu0 0.0
    %1025 = vmatprep.subr.mxu0 0.0
    %1026 = vmatpush2.msra.mxu0 0.0
    %1027 = vmatprep.subr.mxu0 0.0
    %1028 = vmatpush2.msra.mxu0 0.0
    %1029 = vmatprep.subr.mxu0 0.0
    %1030 = vmatpush2.msra.mxu0 0.0
    %1031 = vmatprep.mubr.f32.mxu0 0.0
    %1032 = vmatmul.mubr.f32.gmra.mxu0 %v959
    %v1033 = vpop.f32.mrf.mxu0
    %v1034 = vadd.f32 0.0, %v1033
    %v1035 = vpop.f32.mrf.mxu0
    %v1036 = vadd.f32 0.0, %v1035
    %1037 = vdwg.mxu0
    %1038 = vmatprep.subr.mxu0 %v100
    %1039 = vmatpush1.msra.mxu0 %v99
    %1040 = vmatprep.subr.mxu0 %v96
    %1041 = vmatpush1.msra.mxu0 %v95
    %1042 = vmatprep.subr.mxu0 %v92
    %1043 = vmatpush1.msra.mxu0 %v91
    %1044 = vmatprep.subr.mxu0 %v88
    %1045 = vmatpush1.msra.mxu0 %v87
    %1046 = vmatprep.subr.mxu0 %v84
    %1047 = vmatpush1.msra.mxu0 %v83
    %1048 = vmatprep.subr.mxu0 %v80
    %1049 = vmatpush1.msra.mxu0 %v79
    %1050 = vmatprep.subr.mxu0 %v76
    %1051 = vmatpush1.msra.mxu0 %v75
    %1052 = vmatprep.subr.mxu0 %v72
    %1053 = vmatpush1.msra.mxu0 %v71
    %1054 = vmatprep.subr.mxu0 %v68
    %1055 = vmatpush1.msra.mxu0 %v67
    %1056 = vmatprep.subr.mxu0 %v64
    %1057 = vmatpush1.msra.mxu0 %v63
    %1058 = vmatprep.subr.mxu0 %v60
    %1059 = vmatpush1.msra.mxu0 %v59
    %1060 = vmatprep.subr.mxu0 %v56
    %1061 = vmatpush1.msra.mxu0 %v55
    %1062 = vmatprep.subr.mxu0 %v52
    %1063 = vmatpush1.msra.mxu0 %v51
    %1064 = vmatprep.subr.mxu0 %v48
    %1065 = vmatpush1.msra.mxu0 %v47
    %1066 = vmatprep.subr.mxu0 %v44
    %1067 = vmatpush1.msra.mxu0 %v43
    %1068 = vmatprep.subr.mxu0 %v40
    %1069 = vmatpush1.msra.mxu0 %v39
    %1070 = vmatprep.subr.mxu0 0.0
    %1071 = vmatpush2.msra.mxu0 0.0
    %1072 = vmatprep.subr.mxu0 0.0
    %1073 = vmatpush2.msra.mxu0 0.0
    %1074 = vmatprep.subr.mxu0 0.0
    %1075 = vmatpush2.msra.mxu0 0.0
    %1076 = vmatprep.subr.mxu0 0.0
    %1077 = vmatpush2.msra.mxu0 0.0
    %1078 = vmatprep.subr.mxu0 0.0
    %1079 = vmatpush2.msra.mxu0 0.0
    %1080 = vmatprep.subr.mxu0 0.0
    %1081 = vmatpush2.msra.mxu0 0.0
    %1082 = vmatprep.subr.mxu0 0.0
    %1083 = vmatpush2.msra.mxu0 0.0
    %1084 = vmatprep.subr.mxu0 0.0
    %1085 = vmatpush2.msra.mxu0 0.0
    %1086 = vmatprep.subr.mxu0 0.0
    %1087 = vmatpush2.msra.mxu0 0.0
    %1088 = vmatprep.subr.mxu0 0.0
    %1089 = vmatpush2.msra.mxu0 0.0
    %1090 = vmatprep.subr.mxu0 0.0
    %1091 = vmatpush2.msra.mxu0 0.0
    %1092 = vmatprep.subr.mxu0 0.0
    %1093 = vmatpush2.msra.mxu0 0.0
    %1094 = vmatprep.subr.mxu0 0.0
    %1095 = vmatpush2.msra.mxu0 0.0
    %1096 = vmatprep.subr.mxu0 0.0
    %1097 = vmatpush2.msra.mxu0 0.0
    %1098 = vmatprep.subr.mxu0 0.0
    %1099 = vmatpush2.msra.mxu0 0.0
    %1100 = vmatprep.subr.mxu0 0.0
    %1101 = vmatpush2.msra.mxu0 0.0
    %1102 = vmatprep.mubr.f32.mxu0 0.0
    %1103 = vmatmul.mubr.f32.gmra.mxu0 %v959
    %v1104 = vpop.f32.mrf.mxu0
    %v1105 = vadd.f32 0.0, %v1104
    %v1106 = vpop.f32.mrf.mxu0
    %v1107 = vadd.f32 0.0, %v1106
    %1108 = vdwg.mxu0
    %v1109 = vadd.f32 %v963, %v1034
    %v1110 = vadd.f32 %v964, %v1036
    %v1111 = vadd.f32 %v965, %v1105
    %v1112 = vadd.f32 %v966, %v1107
    %v1113 = vmul.f32 %v1109, 0.5
    %v1114 = vmul.f32 %v1110, 0.5
    %v1115 = vmul.f32 %v1111, 0.5
    %v1116 = vtanh.pop %v1113
    %v1117 = vtanh.pop %v1114
    %v1118 = vtanh.pop %v1115
    %v1119 = vadd.f32 %v1116, 1.0
    %v1120 = vadd.f32 %v1117, 1.0
    %v1121 = vadd.f32 %v1118, 1.0
    %v1122 = vmul.f32 %v1119, 0.5
    %v1123 = vmul.f32 %v1120, 0.5
    %v1124 = vmul.f32 %v1121, 0.5
    %v1125 = vtanh.pop %v1112
    %v1126 = vmul.f32 %v1123, %v957
    %v1127 = vmul.f32 %v1122, %v1125
    %v1128 = vadd.f32 %v1126, %v1127
    %v1129 = vtanh.pop %v1128
    %v1130 = vmul.f32 %v1124, %v1129
    %s1131 = smul.u32 5, 4
    %s1132 = smul.addr %s1131, 8
    %s1133 = scalar_lea.vmem [#allocation2], %s1132
    %v1134 = vld [vmem:[%s1133] sm:$0xff]
    %v1135 = vld [vmem:[%s1133 + $0x8] sm:$0xff]
    %v1136 = vld [vmem:[%s1133 + $0x10] sm:$0xff]
    %v1137 = vld [vmem:[%s1133 + $0x18] sm:$0xff]
    %1138 = vmatprep.subr.mxu0 %v98
    %1139 = vmatpush1.msra.mxu0 %v97
    %1140 = vmatprep.subr.mxu0 %v94
    %1141 = vmatpush1.msra.mxu0 %v93
    %1142 = vmatprep.subr.mxu0 %v90
    %1143 = vmatpush1.msra.mxu0 %v89
    %1144 = vmatprep.subr.mxu0 %v86
    %1145 = vmatpush1.msra.mxu0 %v85
    %1146 = vmatprep.subr.mxu0 %v82
    %1147 = vmatpush1.msra.mxu0 %v81
    %1148 = vmatprep.subr.mxu0 %v78
    %1149 = vmatpush1.msra.mxu0 %v77
    %1150 = vmatprep.subr.mxu0 %v74
    %1151 = vmatpush1.msra.mxu0 %v73
    %1152 = vmatprep.subr.mxu0 %v70
    %1153 = vmatpush1.msra.mxu0 %v69
    %1154 = vmatprep.subr.mxu0 %v66
    %1155 = vmatpush1.msra.mxu0 %v65
    %1156 = vmatprep.subr.mxu0 %v62
    %1157 = vmatpush1.msra.mxu0 %v61
    %1158 = vmatprep.subr.mxu0 %v58
    %1159 = vmatpush1.msra.mxu0 %v57
    %1160 = vmatprep.subr.mxu0 %v54
    %1161 = vmatpush1.msra.mxu0 %v53
    %1162 = vmatprep.subr.mxu0 %v50
    %1163 = vmatpush1.msra.mxu0 %v49
    %1164 = vmatprep.subr.mxu0 %v46
    %1165 = vmatpush1.msra.mxu0 %v45
    %1166 = vmatprep.subr.mxu0 %v42
    %1167 = vmatpush1.msra.mxu0 %v41
    %1168 = vmatprep.subr.mxu0 %v38
    %1169 = vmatpush1.msra.mxu0 %v37
    %1170 = vmatprep.subr.mxu0 0.0
    %1171 = vmatpush2.msra.mxu0 0.0
    %1172 = vmatprep.subr.mxu0 0.0
    %1173 = vmatpush2.msra.mxu0 0.0
    %1174 = vmatprep.subr.mxu0 0.0
    %1175 = vmatpush2.msra.mxu0 0.0
    %1176 = vmatprep.subr.mxu0 0.0
    %1177 = vmatpush2.msra.mxu0 0.0
    %1178 = vmatprep.subr.mxu0 0.0
    %1179 = vmatpush2.msra.mxu0 0.0
    %1180 = vmatprep.subr.mxu0 0.0
    %1181 = vmatpush2.msra.mxu0 0.0
    %1182 = vmatprep.subr.mxu0 0.0
    %1183 = vmatpush2.msra.mxu0 0.0
    %1184 = vmatprep.subr.mxu0 0.0
    %1185 = vmatpush2.msra.mxu0 0.0
    %1186 = vmatprep.subr.mxu0 0.0
    %1187 = vmatpush2.msra.mxu0 0.0
    %1188 = vmatprep.subr.mxu0 0.0
    %1189 = vmatpush2.msra.mxu0 0.0
    %1190 = vmatprep.subr.mxu0 0.0
    %1191 = vmatpush2.msra.mxu0 0.0
    %1192 = vmatprep.subr.mxu0 0.0
    %1193 = vmatpush2.msra.mxu0 0.0
    %1194 = vmatprep.subr.mxu0 0.0
    %1195 = vmatpush2.msra.mxu0 0.0
    %1196 = vmatprep.subr.mxu0 0.0
    %1197 = vmatpush2.msra.mxu0 0.0
    %1198 = vmatprep.subr.mxu0 0.0
    %1199 = vmatpush2.msra.mxu0 0.0
    %1200 = vmatprep.subr.mxu0 0.0
    %1201 = vmatpush2.msra.mxu0 0.0
    %1202 = vmatprep.mubr.f32.mxu0 0.0
    %1203 = vmatmul.mubr.f32.gmra.mxu0 %v1130
    %v1204 = vpop.f32.mrf.mxu0
    %v1205 = vadd.f32 0.0, %v1204
    %v1206 = vpop.f32.mrf.mxu0
    %v1207 = vadd.f32 0.0, %v1206
    %1208 = vdwg.mxu0
    %1209 = vmatprep.subr.mxu0 %v100
    %1210 = vmatpush1.msra.mxu0 %v99
    %1211 = vmatprep.subr.mxu0 %v96
    %1212 = vmatpush1.msra.mxu0 %v95
    %1213 = vmatprep.subr.mxu0 %v92
    %1214 = vmatpush1.msra.mxu0 %v91
    %1215 = vmatprep.subr.mxu0 %v88
    %1216 = vmatpush1.msra.mxu0 %v87
    %1217 = vmatprep.subr.mxu0 %v84
    %1218 = vmatpush1.msra.mxu0 %v83
    %1219 = vmatprep.subr.mxu0 %v80
    %1220 = vmatpush1.msra.mxu0 %v79
    %1221 = vmatprep.subr.mxu0 %v76
    %1222 = vmatpush1.msra.mxu0 %v75
    %1223 = vmatprep.subr.mxu0 %v72
    %1224 = vmatpush1.msra.mxu0 %v71
    %1225 = vmatprep.subr.mxu0 %v68
    %1226 = vmatpush1.msra.mxu0 %v67
    %1227 = vmatprep.subr.mxu0 %v64
    %1228 = vmatpush1.msra.mxu0 %v63
    %1229 = vmatprep.subr.mxu0 %v60
    %1230 = vmatpush1.msra.mxu0 %v59
    %1231 = vmatprep.subr.mxu0 %v56
    %1232 = vmatpush1.msra.mxu0 %v55
    %1233 = vmatprep.subr.mxu0 %v52
    %1234 = vmatpush1.msra.mxu0 %v51
    %1235 = vmatprep.subr.mxu0 %v48
    %1236 = vmatpush1.msra.mxu0 %v47
    %1237 = vmatprep.subr.mxu0 %v44
    %1238 = vmatpush1.msra.mxu0 %v43
    %1239 = vmatprep.subr.mxu0 %v40
    %1240 = vmatpush1.msra.mxu0 %v39
    %1241 = vmatprep.subr.mxu0 0.0
    %1242 = vmatpush2.msra.mxu0 0.0
    %1243 = vmatprep.subr.mxu0 0.0
    %1244 = vmatpush2.msra.mxu0 0.0
    %1245 = vmatprep.subr.mxu0 0.0
    %1246 = vmatpush2.msra.mxu0 0.0
    %1247 = vmatprep.subr.mxu0 0.0
    %1248 = vmatpush2.msra.mxu0 0.0
    %1249 = vmatprep.subr.mxu0 0.0
    %1250 = vmatpush2.msra.mxu0 0.0
    %1251 = vmatprep.subr.mxu0 0.0
    %1252 = vmatpush2.msra.mxu0 0.0
    %1253 = vmatprep.subr.mxu0 0.0
    %1254 = vmatpush2.msra.mxu0 0.0
    %1255 = vmatprep.subr.mxu0 0.0
    %1256 = vmatpush2.msra.mxu0 0.0
    %1257 = vmatprep.subr.mxu0 0.0
    %1258 = vmatpush2.msra.mxu0 0.0
    %1259 = vmatprep.subr.mxu0 0.0
    %1260 = vmatpush2.msra.mxu0 0.0
    %1261 = vmatprep.subr.mxu0 0.0
    %1262 = vmatpush2.msra.mxu0 0.0
    %1263 = vmatprep.subr.mxu0 0.0
    %1264 = vmatpush2.msra.mxu0 0.0
    %1265 = vmatprep.subr.mxu0 0.0
    %1266 = vmatpush2.msra.mxu0 0.0
    %1267 = vmatprep.subr.mxu0 0.0
    %1268 = vmatpush2.msra.mxu0 0.0
    %1269 = vmatprep.subr.mxu0 0.0
    %1270 = vmatpush2.msra.mxu0 0.0
    %1271 = vmatprep.subr.mxu0 0.0
    %1272 = vmatpush2.msra.mxu0 0.0
    %1273 = vmatprep.mubr.f32.mxu0 0.0
    %1274 = vmatmul.mubr.f32.gmra.mxu0 %v1130
    %v1275 = vpop.f32.mrf.mxu0
    %v1276 = vadd.f32 0.0, %v1275
    %v1277 = vpop.f32.mrf.mxu0
    %v1278 = vadd.f32 0.0, %v1277
    %1279 = vdwg.mxu0
    %v1280 = vadd.f32 %v1134, %v1205
    %v1281 = vadd.f32 %v1135, %v1207
    %v1282 = vadd.f32 %v1136, %v1276
    %v1283 = vadd.f32 %v1137, %v1278
    %v1284 = vmul.f32 %v1280, 0.5
    %v1285 = vmul.f32 %v1281, 0.5
    %v1286 = vmul.f32 %v1282, 0.5
    %v1287 = vtanh.pop %v1284
    %v1288 = vtanh.pop %v1285
    %v1289 = vtanh.pop %v1286
    %v1290 = vadd.f32 %v1287, 1.0
    %v1291 = vadd.f32 %v1288, 1.0
    %v1292 = vadd.f32 %v1289, 1.0
    %v1293 = vmul.f32 %v1290, 0.5
    %v1294 = vmul.f32 %v1291, 0.5
    %v1295 = vmul.f32 %v1292, 0.5
    %v1296 = vtanh.pop %v1283
    %v1297 = vmul.f32 %v1294, %v1128
    %v1298 = vmul.f32 %v1293, %v1296
    %v1299 = vadd.f32 %v1297, %v1298
    %v1300 = vtanh.pop %v1299
    %v1301 = vmul.f32 %v1295, %v1300
    %s1302 = smul.u32 6, 4
    %s1303 = smul.addr %s1302, 8
    %s1304 = scalar_lea.vmem [#allocation2], %s1303
    %v1305 = vld [vmem:[%s1304] sm:$0xff]
    %v1306 = vld [vmem:[%s1304 + $0x8] sm:$0xff]
    %v1307 = vld [vmem:[%s1304 + $0x10] sm:$0xff]
    %v1308 = vld [vmem:[%s1304 + $0x18] sm:$0xff]
    %1309 = vmatprep.subr.mxu0 %v98
    %1310 = vmatpush1.msra.mxu0 %v97
    %1311 = vmatprep.subr.mxu0 %v94
    %1312 = vmatpush1.msra.mxu0 %v93
    %1313 = vmatprep.subr.mxu0 %v90
    %1314 = vmatpush1.msra.mxu0 %v89
    %1315 = vmatprep.subr.mxu0 %v86
    %1316 = vmatpush1.msra.mxu0 %v85
    %1317 = vmatprep.subr.mxu0 %v82
    %1318 = vmatpush1.msra.mxu0 %v81
    %1319 = vmatprep.subr.mxu0 %v78
    %1320 = vmatpush1.msra.mxu0 %v77
    %1321 = vmatprep.subr.mxu0 %v74
    %1322 = vmatpush1.msra.mxu0 %v73
    %1323 = vmatprep.subr.mxu0 %v70
    %1324 = vmatpush1.msra.mxu0 %v69
    %1325 = vmatprep.subr.mxu0 %v66
    %1326 = vmatpush1.msra.mxu0 %v65
    %1327 = vmatprep.subr.mxu0 %v62
    %1328 = vmatpush1.msra.mxu0 %v61
    %1329 = vmatprep.subr.mxu0 %v58
    %1330 = vmatpush1.msra.mxu0 %v57
    %1331 = vmatprep.subr.mxu0 %v54
    %1332 = vmatpush1.msra.mxu0 %v53
    %1333 = vmatprep.subr.mxu0 %v50
    %1334 = vmatpush1.msra.mxu0 %v49
    %1335 = vmatprep.subr.mxu0 %v46
    %1336 = vmatpush1.msra.mxu0 %v45
    %1337 = vmatprep.subr.mxu0 %v42
    %1338 = vmatpush1.msra.mxu0 %v41
    %1339 = vmatprep.subr.mxu0 %v38
    %1340 = vmatpush1.msra.mxu0 %v37
    %1341 = vmatprep.subr.mxu0 0.0
    %1342 = vmatpush2.msra.mxu0 0.0
    %1343 = vmatprep.subr.mxu0 0.0
    %1344 = vmatpush2.msra.mxu0 0.0
    %1345 = vmatprep.subr.mxu0 0.0
    %1346 = vmatpush2.msra.mxu0 0.0
    %1347 = vmatprep.subr.mxu0 0.0
    %1348 = vmatpush2.msra.mxu0 0.0
    %1349 = vmatprep.subr.mxu0 0.0
    %1350 = vmatpush2.msra.mxu0 0.0
    %1351 = vmatprep.subr.mxu0 0.0
    %1352 = vmatpush2.msra.mxu0 0.0
    %1353 = vmatprep.subr.mxu0 0.0
    %1354 = vmatpush2.msra.mxu0 0.0
    %1355 = vmatprep.subr.mxu0 0.0
    %1356 = vmatpush2.msra.mxu0 0.0
    %1357 = vmatprep.subr.mxu0 0.0
    %1358 = vmatpush2.msra.mxu0 0.0
    %1359 = vmatprep.subr.mxu0 0.0
    %1360 = vmatpush2.msra.mxu0 0.0
    %1361 = vmatprep.subr.mxu0 0.0
    %1362 = vmatpush2.msra.mxu0 0.0
    %1363 = vmatprep.subr.mxu0 0.0
    %1364 = vmatpush2.msra.mxu0 0.0
    %1365 = vmatprep.subr.mxu0 0.0
    %1366 = vmatpush2.msra.mxu0 0.0
    %1367 = vmatprep.subr.mxu0 0.0
    %1368 = vmatpush2.msra.mxu0 0.0
    %1369 = vmatprep.subr.mxu0 0.0
    %1370 = vmatpush2.msra.mxu0 0.0
    %1371 = vmatprep.subr.mxu0 0.0
    %1372 = vmatpush2.msra.mxu0 0.0
    %1373 = vmatprep.mubr.f32.mxu0 0.0
    %1374 = vmatmul.mubr.f32.gmra.mxu0 %v1301
    %v1375 = vpop.f32.mrf.mxu0
    %v1376 = vadd.f32 0.0, %v1375
    %v1377 = vpop.f32.mrf.mxu0
    %v1378 = vadd.f32 0.0, %v1377
    %1379 = vdwg.mxu0
    %1380 = vmatprep.subr.mxu0 %v100
    %1381 = vmatpush1.msra.mxu0 %v99
    %1382 = vmatprep.subr.mxu0 %v96
    %1383 = vmatpush1.msra.mxu0 %v95
    %1384 = vmatprep.subr.mxu0 %v92
    %1385 = vmatpush1.msra.mxu0 %v91
    %1386 = vmatprep.subr.mxu0 %v88
    %1387 = vmatpush1.msra.mxu0 %v87
    %1388 = vmatprep.subr.mxu0 %v84
    %1389 = vmatpush1.msra.mxu0 %v83
    %1390 = vmatprep.subr.mxu0 %v80
    %1391 = vmatpush1.msra.mxu0 %v79
    %1392 = vmatprep.subr.mxu0 %v76
    %1393 = vmatpush1.msra.mxu0 %v75
    %1394 = vmatprep.subr.mxu0 %v72
    %1395 = vmatpush1.msra.mxu0 %v71
    %1396 = vmatprep.subr.mxu0 %v68
    %1397 = vmatpush1.msra.mxu0 %v67
    %1398 = vmatprep.subr.mxu0 %v64
    %1399 = vmatpush1.msra.mxu0 %v63
    %1400 = vmatprep.subr.mxu0 %v60
    %1401 = vmatpush1.msra.mxu0 %v59
    %1402 = vmatprep.subr.mxu0 %v56
    %1403 = vmatpush1.msra.mxu0 %v55
    %1404 = vmatprep.subr.mxu0 %v52
    %1405 = vmatpush1.msra.mxu0 %v51
    %1406 = vmatprep.subr.mxu0 %v48
    %1407 = vmatpush1.msra.mxu0 %v47
    %1408 = vmatprep.subr.mxu0 %v44
    %1409 = vmatpush1.msra.mxu0 %v43
    %1410 = vmatprep.subr.mxu0 %v40
    %1411 = vmatpush1.msra.mxu0 %v39
    %1412 = vmatprep.subr.mxu0 0.0
    %1413 = vmatpush2.msra.mxu0 0.0
    %1414 = vmatprep.subr.mxu0 0.0
    %1415 = vmatpush2.msra.mxu0 0.0
    %1416 = vmatprep.subr.mxu0 0.0
    %1417 = vmatpush2.msra.mxu0 0.0
    %1418 = vmatprep.subr.mxu0 0.0
    %1419 = vmatpush2.msra.mxu0 0.0
    %1420 = vmatprep.subr.mxu0 0.0
    %1421 = vmatpush2.msra.mxu0 0.0
    %1422 = vmatprep.subr.mxu0 0.0
    %1423 = vmatpush2.msra.mxu0 0.0
    %1424 = vmatprep.subr.mxu0 0.0
    %1425 = vmatpush2.msra.mxu0 0.0
    %1426 = vmatprep.subr.mxu0 0.0
    %1427 = vmatpush2.msra.mxu0 0.0
    %1428 = vmatprep.subr.mxu0 0.0
    %1429 = vmatpush2.msra.mxu0 0.0
    %1430 = vmatprep.subr.mxu0 0.0
    %1431 = vmatpush2.msra.mxu0 0.0
    %1432 = vmatprep.subr.mxu0 0.0
    %1433 = vmatpush2.msra.mxu0 0.0
    %1434 = vmatprep.subr.mxu0 0.0
    %1435 = vmatpush2.msra.mxu0 0.0
    %1436 = vmatprep.subr.mxu0 0.0
    %1437 = vmatpush2.msra.mxu0 0.0
    %1438 = vmatprep.subr.mxu0 0.0
    %1439 = vmatpush2.msra.mxu0 0.0
    %1440 = vmatprep.subr.mxu0 0.0
    %1441 = vmatpush2.msra.mxu0 0.0
    %1442 = vmatprep.subr.mxu0 0.0
    %1443 = vmatpush2.msra.mxu0 0.0
    %1444 = vmatprep.mubr.f32.mxu0 0.0
    %1445 = vmatmul.mubr.f32.gmra.mxu0 %v1301
    %v1446 = vpop.f32.mrf.mxu0
    %v1447 = vadd.f32 0.0, %v1446
    %v1448 = vpop.f32.mrf.mxu0
    %v1449 = vadd.f32 0.0, %v1448
    %1450 = vdwg.mxu0
    %v1451 = vadd.f32 %v1305, %v1376
    %v1452 = vadd.f32 %v1306, %v1378
    %v1453 = vadd.f32 %v1307, %v1447
    %v1454 = vadd.f32 %v1308, %v1449
    %v1455 = vmul.f32 %v1451, 0.5
    %v1456 = vmul.f32 %v1452, 0.5
    %v1457 = vmul.f32 %v1453, 0.5
    %v1458 = vtanh.pop %v1455
    %v1459 = vtanh.pop %v1456
    %v1460 = vtanh.pop %v1457
    %v1461 = vadd.f32 %v1458, 1.0
    %v1462 = vadd.f32 %v1459, 1.0
    %v1463 = vadd.f32 %v1460, 1.0
    %v1464 = vmul.f32 %v1461, 0.5
    %v1465 = vmul.f32 %v1462, 0.5
    %v1466 = vmul.f32 %v1463, 0.5
    %v1467 = vtanh.pop %v1454
    %v1468 = vmul.f32 %v1465, %v1299
    %v1469 = vmul.f32 %v1464, %v1467
    %v1470 = vadd.f32 %v1468, %v1469
    %v1471 = vtanh.pop %v1470
    %v1472 = vmul.f32 %v1466, %v1471
    %s1473 = smul.u32 7, 4
    %s1474 = smul.addr %s1473, 8
    %s1475 = scalar_lea.vmem [#allocation2], %s1474
    %v1476 = vld [vmem:[%s1475] sm:$0xff]
    %v1477 = vld [vmem:[%s1475 + $0x8] sm:$0xff]
    %v1478 = vld [vmem:[%s1475 + $0x10] sm:$0xff]
    %v1479 = vld [vmem:[%s1475 + $0x18] sm:$0xff]
    %1480 = vmatprep.subr.mxu0 %v98
    %1481 = vmatpush1.msra.mxu0 %v97
    %1482 = vmatprep.subr.mxu0 %v94
    %1483 = vmatpush1.msra.mxu0 %v93
    %1484 = vmatprep.subr.mxu0 %v90
    %1485 = vmatpush1.msra.mxu0 %v89
    %1486 = vmatprep.subr.mxu0 %v86
    %1487 = vmatpush1.msra.mxu0 %v85
    %1488 = vmatprep.subr.mxu0 %v82
    %1489 = vmatpush1.msra.mxu0 %v81
    %1490 = vmatprep.subr.mxu0 %v78
    %1491 = vmatpush1.msra.mxu0 %v77
    %1492 = vmatprep.subr.mxu0 %v74
    %1493 = vmatpush1.msra.mxu0 %v73
    %1494 = vmatprep.subr.mxu0 %v70
    %1495 = vmatpush1.msra.mxu0 %v69
    %1496 = vmatprep.subr.mxu0 %v66
    %1497 = vmatpush1.msra.mxu0 %v65
    %1498 = vmatprep.subr.mxu0 %v62
    %1499 = vmatpush1.msra.mxu0 %v61
    %1500 = vmatprep.subr.mxu0 %v58
    %1501 = vmatpush1.msra.mxu0 %v57
    %1502 = vmatprep.subr.mxu0 %v54
    %1503 = vmatpush1.msra.mxu0 %v53
    %1504 = vmatprep.subr.mxu0 %v50
    %1505 = vmatpush1.msra.mxu0 %v49
    %1506 = vmatprep.subr.mxu0 %v46
    %1507 = vmatpush1.msra.mxu0 %v45
    %1508 = vmatprep.subr.mxu0 %v42
    %1509 = vmatpush1.msra.mxu0 %v41
    %1510 = vmatprep.subr.mxu0 %v38
    %1511 = vmatpush1.msra.mxu0 %v37
    %1512 = vmatprep.subr.mxu0 0.0
    %1513 = vmatpush2.msra.mxu0 0.0
    %1514 = vmatprep.subr.mxu0 0.0
    %1515 = vmatpush2.msra.mxu0 0.0
    %1516 = vmatprep.subr.mxu0 0.0
    %1517 = vmatpush2.msra.mxu0 0.0
    %1518 = vmatprep.subr.mxu0 0.0
    %1519 = vmatpush2.msra.mxu0 0.0
    %1520 = vmatprep.subr.mxu0 0.0
    %1521 = vmatpush2.msra.mxu0 0.0
    %1522 = vmatprep.subr.mxu0 0.0
    %1523 = vmatpush2.msra.mxu0 0.0
    %1524 = vmatprep.subr.mxu0 0.0
    %1525 = vmatpush2.msra.mxu0 0.0
    %1526 = vmatprep.subr.mxu0 0.0
    %1527 = vmatpush2.msra.mxu0 0.0
    %1528 = vmatprep.subr.mxu0 0.0
    %1529 = vmatpush2.msra.mxu0 0.0
    %1530 = vmatprep.subr.mxu0 0.0
    %1531 = vmatpush2.msra.mxu0 0.0
    %1532 = vmatprep.subr.mxu0 0.0
    %1533 = vmatpush2.msra.mxu0 0.0
    %1534 = vmatprep.subr.mxu0 0.0
    %1535 = vmatpush2.msra.mxu0 0.0
    %1536 = vmatprep.subr.mxu0 0.0
    %1537 = vmatpush2.msra.mxu0 0.0
    %1538 = vmatprep.subr.mxu0 0.0
    %1539 = vmatpush2.msra.mxu0 0.0
    %1540 = vmatprep.subr.mxu0 0.0
    %1541 = vmatpush2.msra.mxu0 0.0
    %1542 = vmatprep.subr.mxu0 0.0
    %1543 = vmatpush2.msra.mxu0 0.0
    %1544 = vmatprep.mubr.f32.mxu0 0.0
    %1545 = vmatmul.mubr.f32.gmra.mxu0 %v1472
    %v1546 = vpop.f32.mrf.mxu0
    %v1547 = vadd.f32 0.0, %v1546
    %v1548 = vpop.f32.mrf.mxu0
    %v1549 = vadd.f32 0.0, %v1548
    %1550 = vdwg.mxu0
    %1551 = vmatprep.subr.mxu0 %v100
    %1552 = vmatpush1.msra.mxu0 %v99
    %1553 = vmatprep.subr.mxu0 %v96
    %1554 = vmatpush1.msra.mxu0 %v95
    %1555 = vmatprep.subr.mxu0 %v92
    %1556 = vmatpush1.msra.mxu0 %v91
    %1557 = vmatprep.subr.mxu0 %v88
    %1558 = vmatpush1.msra.mxu0 %v87
    %1559 = vmatprep.subr.mxu0 %v84
    %1560 = vmatpush1.msra.mxu0 %v83
    %1561 = vmatprep.subr.mxu0 %v80
    %1562 = vmatpush1.msra.mxu0 %v79
    %1563 = vmatprep.subr.mxu0 %v76
    %1564 = vmatpush1.msra.mxu0 %v75
    %1565 = vmatprep.subr.mxu0 %v72
    %1566 = vmatpush1.msra.mxu0 %v71
    %1567 = vmatprep.subr.mxu0 %v68
    %1568 = vmatpush1.msra.mxu0 %v67
    %1569 = vmatprep.subr.mxu0 %v64
    %1570 = vmatpush1.msra.mxu0 %v63
    %1571 = vmatprep.subr.mxu0 %v60
    %1572 = vmatpush1.msra.mxu0 %v59
    %1573 = vmatprep.subr.mxu0 %v56
    %1574 = vmatpush1.msra.mxu0 %v55
    %1575 = vmatprep.subr.mxu0 %v52
    %1576 = vmatpush1.msra.mxu0 %v51
    %1577 = vmatprep.subr.mxu0 %v48
    %1578 = vmatpush1.msra.mxu0 %v47
    %1579 = vmatprep.subr.mxu0 %v44
    %1580 = vmatpush1.msra.mxu0 %v43
    %1581 = vmatprep.subr.mxu0 %v40
    %1582 = vmatpush1.msra.mxu0 %v39
    %1583 = vmatprep.subr.mxu0 0.0
    %1584 = vmatpush2.msra.mxu0 0.0
    %1585 = vmatprep.subr.mxu0 0.0
    %1586 = vmatpush2.msra.mxu0 0.0
    %1587 = vmatprep.subr.mxu0 0.0
    %1588 = vmatpush2.msra.mxu0 0.0
    %1589 = vmatprep.subr.mxu0 0.0
    %1590 = vmatpush2.msra.mxu0 0.0
    %1591 = vmatprep.subr.mxu0 0.0
    %1592 = vmatpush2.msra.mxu0 0.0
    %1593 = vmatprep.subr.mxu0 0.0
    %1594 = vmatpush2.msra.mxu0 0.0
    %1595 = vmatprep.subr.mxu0 0.0
    %1596 = vmatpush2.msra.mxu0 0.0
    %1597 = vmatprep.subr.mxu0 0.0
    %1598 = vmatpush2.msra.mxu0 0.0
    %1599 = vmatprep.subr.mxu0 0.0
    %1600 = vmatpush2.msra.mxu0 0.0
    %1601 = vmatprep.subr.mxu0 0.0
    %1602 = vmatpush2.msra.mxu0 0.0
    %1603 = vmatprep.subr.mxu0 0.0
    %1604 = vmatpush2.msra.mxu0 0.0
    %1605 = vmatprep.subr.mxu0 0.0
    %1606 = vmatpush2.msra.mxu0 0.0
    %1607 = vmatprep.subr.mxu0 0.0
    %1608 = vmatpush2.msra.mxu0 0.0
    %1609 = vmatprep.subr.mxu0 0.0
    %1610 = vmatpush2.msra.mxu0 0.0
    %1611 = vmatprep.subr.mxu0 0.0
    %1612 = vmatpush2.msra.mxu0 0.0
    %1613 = vmatprep.subr.mxu0 0.0
    %1614 = vmatpush2.msra.mxu0 0.0
    %1615 = vmatprep.mubr.f32.mxu0 0.0
    %1616 = vmatmul.mubr.f32.gmra.mxu0 %v1472
    %v1617 = vpop.f32.mrf.mxu0
    %v1618 = vadd.f32 0.0, %v1617
    %v1619 = vpop.f32.mrf.mxu0
    %v1620 = vadd.f32 0.0, %v1619
    %1621 = vdwg.mxu0
    %v1622 = vadd.f32 %v1476, %v1547
    %v1623 = vadd.f32 %v1477, %v1549
    %v1624 = vadd.f32 %v1478, %v1618
    %v1625 = vadd.f32 %v1479, %v1620
    %v1626 = vmul.f32 %v1622, 0.5
    %v1627 = vmul.f32 %v1623, 0.5
    %v1628 = vmul.f32 %v1624, 0.5
    %v1629 = vtanh.pop %v1626
    %v1630 = vtanh.pop %v1627
    %v1631 = vtanh.pop %v1628
    %v1632 = vadd.f32 %v1629, 1.0
    %v1633 = vadd.f32 %v1630, 1.0
    %v1634 = vadd.f32 %v1631, 1.0
    %v1635 = vmul.f32 %v1632, 0.5
    %v1636 = vmul.f32 %v1633, 0.5
    %v1637 = vmul.f32 %v1634, 0.5
    %v1638 = vtanh.pop %v1625
    %v1639 = vmul.f32 %v1636, %v1470
    %v1640 = vmul.f32 %v1635, %v1638
    %v1641 = vadd.f32 %v1639, %v1640
    %v1642 = vtanh.pop %v1641
    %v1643 = vmul.f32 %v1637, %v1642
    %v1644 = vld [vmem:[%s2] sm:$0xf]
    %1645 = vmatprep.subr.mxu0 %v98
    %1646 = vmatpush1.msra.mxu0 %v97
    %1647 = vmatprep.subr.mxu0 %v94
    %1648 = vmatpush1.msra.mxu0 %v93
    %1649 = vmatprep.subr.mxu0 %v90
    %1650 = vmatpush1.msra.mxu0 %v89
    %1651 = vmatprep.subr.mxu0 %v86
    %1652 = vmatpush1.msra.mxu0 %v85
    %1653 = vmatprep.subr.mxu0 %v82
    %1654 = vmatpush1.msra.mxu0 %v81
    %1655 = vmatprep.subr.mxu0 %v78
    %1656 = vmatpush1.msra.mxu0 %v77
    %1657 = vmatprep.subr.mxu0 %v74
    %1658 = vmatpush1.msra.mxu0 %v73
    %1659 = vmatprep.subr.mxu0 %v70
    %1660 = vmatpush1.msra.mxu0 %v69
    %1661 = vmatprep.subr.mxu0 %v66
    %1662 = vmatpush1.msra.mxu0 %v65
    %1663 = vmatprep.subr.mxu0 %v62
    %1664 = vmatpush1.msra.mxu0 %v61
    %1665 = vmatprep.subr.mxu0 %v58
    %1666 = vmatpush1.msra.mxu0 %v57
    %1667 = vmatprep.subr.mxu0 %v54
    %1668 = vmatpush1.msra.mxu0 %v53
    %1669 = vmatprep.subr.mxu0 %v50
    %1670 = vmatpush1.msra.mxu0 %v49
    %1671 = vmatprep.subr.mxu0 %v46
    %1672 = vmatpush1.msra.mxu0 %v45
    %1673 = vmatprep.subr.mxu0 %v42
    %1674 = vmatpush1.msra.mxu0 %v41
    %1675 = vmatprep.subr.mxu0 %v38
    %1676 = vmatpush1.msra.mxu0 %v37
    %1677 = vmatprep.subr.mxu0 0.0
    %1678 = vmatpush2.msra.mxu0 0.0
    %1679 = vmatprep.subr.mxu0 0.0
    %1680 = vmatpush2.msra.mxu0 0.0
    %1681 = vmatprep.subr.mxu0 0.0
    %1682 = vmatpush2.msra.mxu0 0.0
    %1683 = vmatprep.subr.mxu0 0.0
    %1684 = vmatpush2.msra.mxu0 0.0
    %1685 = vmatprep.subr.mxu0 0.0
    %1686 = vmatpush2.msra.mxu0 0.0
    %1687 = vmatprep.subr.mxu0 0.0
    %1688 = vmatpush2.msra.mxu0 0.0
    %1689 = vmatprep.subr.mxu0 0.0
    %1690 = vmatpush2.msra.mxu0 0.0
    %1691 = vmatprep.subr.mxu0 0.0
    %1692 = vmatpush2.msra.mxu0 0.0
    %1693 = vmatprep.subr.mxu0 0.0
    %1694 = vmatpush2.msra.mxu0 0.0
    %1695 = vmatprep.subr.mxu0 0.0
    %1696 = vmatpush2.msra.mxu0 0.0
    %1697 = vmatprep.subr.mxu0 0.0
    %1698 = vmatpush2.msra.mxu0 0.0
    %1699 = vmatprep.subr.mxu0 0.0
    %1700 = vmatpush2.msra.mxu0 0.0
    %1701 = vmatprep.subr.mxu0 0.0
    %1702 = vmatpush2.msra.mxu0 0.0
    %1703 = vmatprep.subr.mxu0 0.0
    %1704 = vmatpush2.msra.mxu0 0.0
    %1705 = vmatprep.subr.mxu0 0.0
    %1706 = vmatpush2.msra.mxu0 0.0
    %1707 = vmatprep.subr.mxu0 0.0
    %1708 = vmatpush2.msra.mxu0 0.0
    %1709 = vmatprep.mubr.f32.mxu0 0.0
    %1710 = vmatmul.mubr.f32.gmra.mxu0 %v1643
    %v1711 = vpop.f32.mrf.mxu0
    %v1712 = vadd.f32 0.0, %v1711
    %v1713 = vpop.f32.mrf.mxu0
    %v1714 = vadd.f32 0.0, %v1713
    %1715 = vdwg.mxu0
    %1716 = vmatprep.subr.mxu0 %v100
    %1717 = vmatpush1.msra.mxu0 %v99
    %1718 = vmatprep.subr.mxu0 %v96
    %1719 = vmatpush1.msra.mxu0 %v95
    %1720 = vmatprep.subr.mxu0 %v92
    %1721 = vmatpush1.msra.mxu0 %v91
    %1722 = vmatprep.subr.mxu0 %v88
    %1723 = vmatpush1.msra.mxu0 %v87
    %1724 = vmatprep.subr.mxu0 %v84
    %1725 = vmatpush1.msra.mxu0 %v83
    %1726 = vmatprep.subr.mxu0 %v80
    %1727 = vmatpush1.msra.mxu0 %v79
    %1728 = vmatprep.subr.mxu0 %v76
    %1729 = vmatpush1.msra.mxu0 %v75
    %1730 = vmatprep.subr.mxu0 %v72
    %1731 = vmatpush1.msra.mxu0 %v71
    %1732 = vmatprep.subr.mxu0 %v68
    %1733 = vmatpush1.msra.mxu0 %v67
    %1734 = vmatprep.subr.mxu0 %v64
    %1735 = vmatpush1.msra.mxu0 %v63
    %1736 = vmatprep.subr.mxu0 %v60
    %1737 = vmatpush1.msra.mxu0 %v59
    %1738 = vmatprep.subr.mxu0 %v56
    %1739 = vmatpush1.msra.mxu0 %v55
    %1740 = vmatprep.subr.mxu0 %v52
    %1741 = vmatpush1.msra.mxu0 %v51
    %1742 = vmatprep.subr.mxu0 %v48
    %1743 = vmatpush1.msra.mxu0 %v47
    %1744 = vmatprep.subr.mxu0 %v44
    %1745 = vmatpush1.msra.mxu0 %v43
    %1746 = vmatprep.subr.mxu0 %v40
    %1747 = vmatpush1.msra.mxu0 %v39
    %1748 = vmatprep.subr.mxu0 0.0
    %1749 = vmatpush2.msra.mxu0 0.0
    %1750 = vmatprep.subr.mxu0 0.0
    %1751 = vmatpush2.msra.mxu0 0.0
    %1752 = vmatprep.subr.mxu0 0.0
    %1753 = vmatpush2.msra.mxu0 0.0
    %1754 = vmatprep.subr.mxu0 0.0
    %1755 = vmatpush2.msra.mxu0 0.0
    %1756 = vmatprep.subr.mxu0 0.0
    %1757 = vmatpush2.msra.mxu0 0.0
    %1758 = vmatprep.subr.mxu0 0.0
    %1759 = vmatpush2.msra.mxu0 0.0
    %1760 = vmatprep.subr.mxu0 0.0
    %1761 = vmatpush2.msra.mxu0 0.0
    %1762 = vmatprep.subr.mxu0 0.0
    %1763 = vmatpush2.msra.mxu0 0.0
    %1764 = vmatprep.subr.mxu0 0.0
    %1765 = vmatpush2.msra.mxu0 0.0
    %1766 = vmatprep.subr.mxu0 0.0
    %1767 = vmatpush2.msra.mxu0 0.0
    %1768 = vmatprep.subr.mxu0 0.0
    %1769 = vmatpush2.msra.mxu0 0.0
    %1770 = vmatprep.subr.mxu0 0.0
    %1771 = vmatpush2.msra.mxu0 0.0
    %1772 = vmatprep.subr.mxu0 0.0
    %1773 = vmatpush2.msra.mxu0 0.0
    %1774 = vmatprep.subr.mxu0 0.0
    %1775 = vmatpush2.msra.mxu0 0.0
    %1776 = vmatprep.subr.mxu0 0.0
    %1777 = vmatpush2.msra.mxu0 0.0
    %1778 = vmatprep.subr.mxu0 0.0
    %1779 = vmatpush2.msra.mxu0 0.0
    %1780 = vmatprep.mubr.f32.mxu0 0.0
    %1781 = vmatmul.mubr.f32.gmra.mxu0 %v1643
    %v1782 = vpop.f32.mrf.mxu0
    %v1783 = vadd.f32 0.0, %v1782
    %v1784 = vpop.f32.mrf.mxu0
    %v1785 = vadd.f32 0.0, %v1784
    %1786 = vdwg.mxu0
    %v1788 = vlaneseq
    %v1789 = vshrl.u32 %v1788, 7
    %v1790 = vsub.s32 0, %v1789
    %v1791 = vrot.slane %v1644, %v1790
    %v1792 = vlaneseq
    %v1793 = vshrl.u32 %v1792, 7
    %v1794 = vsub.s32 1, %v1793
    %v1795 = vrot.slane %v1644, %v1794
    %v1796 = vlaneseq
    %v1797 = vshrl.u32 %v1796, 7
    %v1798 = vsub.s32 2, %v1797
    %v1799 = vrot.slane %v1644, %v1798
    %v1800 = vlaneseq
    %v1801 = vshrl.u32 %v1800, 7
    %v1802 = vsub.s32 3, %v1801
    %v1803 = vrot.slane %v1644, %v1802
    %v1808 = vadd.f32 %v1791, %v1712
    %v1809 = vadd.f32 %v1795, %v1714
    %v1810 = vadd.f32 %v1799, %v1783
    %v1811 = vadd.f32 %v1803, %v1785
    %v1812 = vmul.f32 %v1808, 0.5
    %v1813 = vmul.f32 %v1809, 0.5
    %v1814 = vmul.f32 %v1810, 0.5
    %v1815 = vtanh.pop %v1812
    %v1816 = vtanh.pop %v1813
    %v1817 = vtanh.pop %v1814
    %v1818 = vadd.f32 %v1815, 1.0
    %v1819 = vadd.f32 %v1816, 1.0
    %v1820 = vadd.f32 %v1817, 1.0
    %v1821 = vmul.f32 %v1818, 0.5
    %v1822 = vmul.f32 %v1819, 0.5
    %v1823 = vmul.f32 %v1820, 0.5
    %v1824 = vtanh.pop %v1811
    %v1825 = vmul.f32 %v1822, %v1641
    %v1826 = vmul.f32 %v1821, %v1824
    %v1827 = vadd.f32 %v1825, %v1826
    %v1828 = vtanh.pop %v1827
    %v1829 = vmul.f32 %v1823, %v1828
    %v1830 = vld [vmem:[%s4] sm:$0xff]
    %v1831 = vld [vmem:[%s4 + $0x8] sm:$0xff]
    %v1832 = vld [vmem:[%s4 + $0x10] sm:$0xff]
    %v1833 = vld [vmem:[%s4 + $0x18] sm:$0xff]
    %v1834 = vld [vmem:[%s4 + $0x20] sm:$0xff]
    %v1835 = vld [vmem:[%s4 + $0x28] sm:$0xff]
    %v1836 = vld [vmem:[%s4 + $0x30] sm:$0xff]
    %v1837 = vld [vmem:[%s4 + $0x38] sm:$0xff]
    %v1838 = vld [vmem:[%s5] sm:$0x1]
    %v1840 = vlaneseq
    %v1841 = vshrl.u32 %v1840, 7
    %v1842 = vsub.s32 0, %v1841
    %v1843 = vrot.slane %v1838, %v1842
    %1846 = vrot.lane.b32.xlu0 %v1829, 64
    %v1847 = vpop.permute.xlu0 %1846
    %vm1848 = vcmask 523264
    %v1849 = vsel %vm1848, %v1847, 0
    %1851 = vmatprep.subr.mxu0 0.0
    %1852 = vmatpush1.msra.mxu0 0.0
    %1853 = vmatprep.subr.mxu0 0.0
    %1854 = vmatpush1.msra.mxu0 0.0
    %1855 = vmatprep.subr.mxu0 0.0
    %1856 = vmatpush1.msra.mxu0 0.0
    %1857 = vmatprep.subr.mxu0 0.0
    %1858 = vmatpush1.msra.mxu0 0.0
    %1859 = vmatprep.subr.mxu0 0.0
    %1860 = vmatpush1.msra.mxu0 0.0
    %1861 = vmatprep.subr.mxu0 0.0
    %1862 = vmatpush1.msra.mxu0 0.0
    %1863 = vmatprep.subr.mxu0 0.0
    %1864 = vmatpush1.msra.mxu0 0.0
    %1865 = vmatprep.subr.mxu0 0.0
    %1866 = vmatpush1.msra.mxu0 0.0
    %1867 = vmatprep.subr.mxu0 0.0
    %1868 = vmatpush1.msra.mxu0 %v1837
    %1869 = vmatprep.subr.mxu0 0.0
    %1870 = vmatpush1.msra.mxu0 %v1836
    %1871 = vmatprep.subr.mxu0 0.0
    %1872 = vmatpush1.msra.mxu0 %v1835
    %1873 = vmatprep.subr.mxu0 0.0
    %1874 = vmatpush1.msra.mxu0 %v1834
    %1875 = vmatprep.subr.mxu0 0.0
    %1876 = vmatpush1.msra.mxu0 %v1833
    %1877 = vmatprep.subr.mxu0 0.0
    %1878 = vmatpush1.msra.mxu0 %v1832
    %1879 = vmatprep.subr.mxu0 0.0
    %1880 = vmatpush1.msra.mxu0 %v1831
    %1881 = vmatprep.subr.mxu0 0.0
    %1882 = vmatpush1.msra.mxu0 %v1830
    %1883 = vmatprep.subr.mxu0 0.0
    %1884 = vmatpush2.msra.mxu0 0.0
    %1885 = vmatprep.subr.mxu0 0.0
    %1886 = vmatpush2.msra.mxu0 0.0
    %1887 = vmatprep.subr.mxu0 0.0
    %1888 = vmatpush2.msra.mxu0 0.0
    %1889 = vmatprep.subr.mxu0 0.0
    %1890 = vmatpush2.msra.mxu0 0.0
    %1891 = vmatprep.subr.mxu0 0.0
    %1892 = vmatpush2.msra.mxu0 0.0
    %1893 = vmatprep.subr.mxu0 0.0
    %1894 = vmatpush2.msra.mxu0 0.0
    %1895 = vmatprep.subr.mxu0 0.0
    %1896 = vmatpush2.msra.mxu0 0.0
    %1897 = vmatprep.subr.mxu0 0.0
    %1898 = vmatpush2.msra.mxu0 0.0
    %1899 = vmatprep.subr.mxu0 0.0
    %1900 = vmatpush2.msra.mxu0 0.0
    %1901 = vmatprep.subr.mxu0 0.0
    %1902 = vmatpush2.msra.mxu0 0.0
    %1903 = vmatprep.subr.mxu0 0.0
    %1904 = vmatpush2.msra.mxu0 0.0
    %1905 = vmatprep.subr.mxu0 0.0
    %1906 = vmatpush2.msra.mxu0 0.0
    %1907 = vmatprep.subr.mxu0 0.0
    %1908 = vmatpush2.msra.mxu0 0.0
    %1909 = vmatprep.subr.mxu0 0.0
    %1910 = vmatpush2.msra.mxu0 0.0
    %1911 = vmatprep.subr.mxu0 0.0
    %1912 = vmatpush2.msra.mxu0 0.0
    %1913 = vmatprep.subr.mxu0 0.0
    %1914 = vmatpush2.msra.mxu0 0.0
    %1915 = vmatprep.mubr.f32.mxu0 0.0
    %1916 = vmatmul.mubr.f32.gmra.mxu0 %v1849
    %v1917 = vpop.f32.mrf.mxu0
    %v1918 = vadd.f32 %v1843, %v1917
    %v1919 = vpop.f32.mrf.mxu0
    %1920 = vdwg.mxu0
    %vm1921 = vcmask 15360
    %v1922 = vsel %vm1921, %v1918, -inf
    %1923 = vmax.xlane.f32.xlu0 %v1922
    %v1924 = vpop.xlane.xlu0 %1923
    %v1925 = vsub.f32 %v1918, %v1924
    %v1926 = vmul.f32 %v1925, 1.442695
    %v1927 = vpow.pop %v1926
    %v1928 = vsel %vm1921, %v1927, 0.0
    %1929 = vadd.xlane.f32.xlu0 %v1928
    %v1930 = vpop.xlane.xlu0 %1929
    %v1931 = vrcp.pop %v1930
    %v1932 = vmul.f32 %v1927, %v1931
    %1933 = vst.msk [vmem:[%s6] sm:$0xff] %vm1921, %v1932
    // Predicated region
    $region30: #{tpu_custom_call.1} parent=1 // pred_check
      _
    $region31: #{tpu_custom_call.1} parent=1 // pred_check_branch
      %1935 = sbr.rel (0) target = $region33
    $region32: #{tpu_custom_call.1} parent=1 // pred_region
      _
    $region33: #{tpu_custom_call.1} parent=1 // pred_fallthru
      _
    // Predicated region
    $region34: #{tpu_custom_call.1} parent=1 // pred_check
      _
    $region35: #{tpu_custom_call.1} parent=1 // pred_check_branch
      %1937 = sbr.rel (0) target = $region37
    $region36: #{tpu_custom_call.1} parent=1 // pred_region
      _
    $region37: #{tpu_custom_call.1} parent=1 // pred_fallthru
      _
    %1938 = vsyncpa [#allocation4], 1

</llo_original>
